<compile_context>
chip_gen: v6e
topology: v6e:2x2x1
jax: 0.10.0
libtpu: 0.0.40
codegen_flags: <defaults>
</compile_context>

<pallas_src>
import math

import jax
import jax.numpy as jnp
from jax import lax
from jax.experimental import pallas as pl
from jax.experimental.pallas import tpu as pltpu

HIDDEN_DIM = 16
INPUT_DIM = 2
OUTPUT_DIM = 1
SUBLANES = 8
LANES = 128


# ----------------------------------------------------------------------------
# Kernel: full GRU recurrence + output head, everything resident in VMEM.
# ----------------------------------------------------------------------------
def gru_adder_kernel(x_ref, h0_ref, wi_ref, wh_ref, bi_ref, bh_ref,
                     wl_ref, bl_ref, y_ref, hT_ref, gi_scr, hseq_scr):
    TB, I = x_ref.shape            # T * Bp, input dim
    Bp, H = h0_ref.shape
    T = TB // Bp
    H2 = 2 * H

    # Hoisted input projection for ALL timesteps, done on the VPU: a K=2 MXU
    # matmul would pay full weight-load/drain latency for ~no arithmetic.
    x = x_ref[...]                                         # (T*Bp, I)
    gi = bi_ref[...]                                       # (1, 3H) broadcasts
    for k in range(I):                                     # I is tiny & static
        gi = gi + x[:, k:k + 1] * wi_ref[k:k + 1, :]
    gi_scr[...] = gi                                       # (T*Bp, 3H)

    wh = wh_ref[...]               # (H, 3H)  gate order [r | z | n]
    # Hoist the (1,3H)->(Bp,3H) bias broadcast out of the unrolled loop.
    bh_b = jnp.broadcast_to(bh_ref[...], (Bp, 3 * H))

    def step(t, h):
        row = pl.multiple_of(t * Bp, SUBLANES)             # aligned sublane addr
        gi_t = gi_scr[pl.ds(row, Bp), :]                   # (Bp, 3H)
        # Single fused hidden-state matmul per step (the only MXU op on chain).
        gh = jnp.dot(h, wh, preferred_element_type=jnp.float32) + bh_b
        # Fused r|z sigmoid: one 32-lane EUP push instead of two 16-lane ones.
        rz = jax.nn.sigmoid(gi_t[:, :H2] + gh[:, :H2])
        r = rz[:, :H]
        z = rz[:, H:]
        n = jnp.tanh(gi_t[:, H2:] + r * gh[:, H2:])
        h_new = n + z * (h - n)                            # 3 VALU ops
        hseq_scr[pl.ds(row, Bp), :] = h_new                # head runs later
        return h_new

    # Fully unrolled recurrence (static, small trip count).
    hT_ref[...] = lax.fori_loop(0, T, step, h0_ref[...], unroll=True)

    # Output head hoisted out of the loop: one (1,H) x (T*Bp,H)^T matmul and a
    # single lane-dense (1, T*Bp) store (T*Bp padded to a multiple of 128).
    logits = pl.dot(wl_ref[...], hseq_scr[...], trans_b=True)   # (1, T*Bp)
    y_ref[...] = jax.nn.sigmoid(logits + bl_ref[...])


# ----------------------------------------------------------------------------
# Wrapper: parameter splitting / padding (glue), then one pallas_call.
# ----------------------------------------------------------------------------
def _pad_batch(B, T):
    """Round B up to a sublane multiple; additionally make T*Bp a multiple of
    128 (unmasked lane-dense y store) when that keeps the padding modest."""
    sub = ((B + SUBLANES - 1) // SUBLANES) * SUBLANES
    lane_mult = max(SUBLANES, LANES // math.gcd(T, LANES))
    dense = ((B + lane_mult - 1) // lane_mult) * lane_mult
    return dense if dense <= max(sub, LANES) else sub


@jax.jit
def recurrent_binary_adder(x, hidden_state, params):
    """x: (T, B, I) float32; hidden_state: (1, B, H) float32.

    Returns (finalOutput (T, B, 1), newHiddenState (1, B, H)), matching the
    PyTorch module's forward semantics.
    """
    T, B, I = x.shape
    H = params["w_hh"].shape[1]
    Bp = _pad_batch(B, T)

    wi = params["w_ih"].T                      # (I, 3H), gate order r|z|n
    wh = params["w_hh"].T                      # (H, 3H)
    bi = params["b_ih"].reshape(1, 3 * H)      # b_ih
    bh = params["b_hh"].reshape(1, 3 * H)      # b_hh (n-part stays gated by r)
    wl = params["w_lin"]                       # (1, H)
    bl = params["b_lin"].reshape(1, 1)

    # Pad batch to a sublane-friendly width; time-major flattened to (T*Bp, I).
    xp = jnp.pad(x.astype(jnp.float32), ((0, 0), (0, Bp - B), (0, 0)))
    xp = xp.reshape(T * Bp, I)
    h0p = jnp.pad(hidden_state[0].astype(jnp.float32), ((0, Bp - B), (0, 0)))

    vmem = pl.BlockSpec(memory_space=pltpu.MemorySpace.VMEM)

    y_row, h_final = pl.pallas_call(
        gru_adder_kernel,
        out_shape=(
            jax.ShapeDtypeStruct((1, T * Bp), jnp.float32),   # lane-dense y
            jax.ShapeDtypeStruct((Bp, H), jnp.float32),       # final hidden
        ),
        in_specs=[vmem] * 8,
        out_specs=(vmem, vmem),
        scratch_shapes=[
            pltpu.VMEM((T * Bp, 3 * H), jnp.float32),   # gi: input projections
            pltpu.VMEM((T * Bp, H), jnp.float32),       # h_t sequence
        ],
    )(xp, h0p, wi, wh, bi, bh, wl, bl)

    y = y_row.reshape(T, Bp, 1)[:, :B, :]          # (T, B, 1)
    return y, h_final[:B][None]                    # (T, B, 1), (1, B, H)


# ----------------------------------------------------------------------------
# Pure-JAX reference (mirrors torch.nn.GRU + Linear + Sigmoid semantics).
# ----------------------------------------------------------------------------
def reference_forward(x, hidden_state, params):
    H = params["w_hh"].shape[1]
    w_ih, w_hh = params["w_ih"], params["w_hh"]
    b_ih, b_hh = params["b_ih"], params["b_hh"]
    w_lin, b_lin = params["w_lin"], params["b_lin"]

    def cell(h, x_t):
        gi = x_t @ w_ih.T + b_ih
        gh = h @ w_hh.T + b_hh
        i_r, i_z, i_n = gi[:, :H], gi[:, H:2 * H], gi[:, 2 * H:]
        h_r, h_z, h_n = gh[:, :H], gh[:, H:2 * H], gh[:, 2 * H:]
        r = jax.nn.sigmoid(i_r + h_r)
        z = jax.nn.sigmoid(i_z + h_z)
        n = jnp.tanh(i_n + r * h_n)
        h_new = (1.0 - z) * n + z * h
        return h_new, h_new

    h_final, h_seq = lax.scan(cell, hidden_state[0], x)
    y = jax.nn.sigmoid(h_seq @ w_lin.T + b_lin)
    return y, h_final[None]


# ----------------------------------------------------------------------------
# Main
# ----------------------------------------------------------------------------
if __name__ == "__main__":
    T, B = 8, 4
    key = jax.random.PRNGKey(0)
    k1, k2, k3, k4, k5, k6, k7 = jax.random.split(key, 7)

    scale = 1.0 / jnp.sqrt(HIDDEN_DIM)
    params = {
        "w_ih": jax.random.uniform(k1, (3 * HIDDEN_DIM, INPUT_DIM),
                                   minval=-scale, maxval=scale, dtype=jnp.float32),
        "w_hh": jax.random.uniform(k2, (3 * HIDDEN_DIM, HIDDEN_DIM),
                                   minval=-scale, maxval=scale, dtype=jnp.float32),
        "b_ih": jax.random.uniform(k3, (3 * HIDDEN_DIM,),
                                   minval=-scale, maxval=scale, dtype=jnp.float32),
        "b_hh": jax.random.uniform(k4, (3 * HIDDEN_DIM,),
                                   minval=-scale, maxval=scale, dtype=jnp.float32),
        "w_lin": jax.random.uniform(k5, (OUTPUT_DIM, HIDDEN_DIM),
                                    minval=-scale, maxval=scale, dtype=jnp.float32),
        "b_lin": jax.random.uniform(k6, (OUTPUT_DIM,),
                                    minval=-scale, maxval=scale, dtype=jnp.float32),
    }

    # Binary-adder style input: random bit pairs, shape (seq, batch, 2).
    x = jax.random.bernoulli(k7, 0.5, (T, B, INPUT_DIM)).astype(jnp.float32)
    h0 = jnp.zeros((1, B, HIDDEN_DIM), dtype=jnp.float32)  # initHidden analogue

    y, h_new = recurrent_binary_adder(x, h0, params)
    jax.block_until_ready((y, h_new))

    y_ref, h_ref = reference_forward(x, h0, params)
    assert y.shape == (T, B, OUTPUT_DIM) and h_new.shape == (1, B, HIDDEN_DIM)
    assert jnp.allclose(y, y_ref, atol=2e-5, rtol=1e-5)
    assert jnp.allclose(h_new, h_ref, atol=2e-5, rtol=1e-5)

    print("KERNEL_OK")
</pallas_src>

<mosaic_0001>
module attributes {stable_mosaic.version = 11 : i64} {
  func.func @gru_adder_kernel(%arg0: memref<128x2xf32, #tpu.memory_space<vmem>>, %arg1: memref<16x16xf32, #tpu.memory_space<vmem>>, %arg2: memref<2x48xf32, #tpu.memory_space<vmem>>, %arg3: memref<16x48xf32, #tpu.memory_space<vmem>>, %arg4: memref<1x48xf32, #tpu.memory_space<vmem>>, %arg5: memref<1x48xf32, #tpu.memory_space<vmem>>, %arg6: memref<1x16xf32, #tpu.memory_space<vmem>>, %arg7: memref<1x1xf32, #tpu.memory_space<vmem>>, %arg8: memref<1x128xf32, #tpu.memory_space<vmem>>, %arg9: memref<16x16xf32, #tpu.memory_space<vmem>>, %arg10: memref<128x48xf32, #tpu.memory_space<vmem>>, %arg11: memref<128x16xf32, #tpu.memory_space<vmem>>) attributes {dimension_semantics = [], scalar_prefetch = 0 : i64, scratch_operands = 2 : i64, tpu.core_type = #tpu.core_type<tc>} {
    %c0 = arith.constant 0 : index
    %c0_0 = arith.constant 0 : index
    %0 = vector.load %arg0[%c0, %c0_0] : memref<128x2xf32, #tpu.memory_space<vmem>>, vector<128x2xf32>
    %c0_1 = arith.constant 0 : index
    %c0_2 = arith.constant 0 : index
    %1 = vector.load %arg4[%c0_1, %c0_2] : memref<1x48xf32, #tpu.memory_space<vmem>>, vector<1x48xf32>
    %2 = vector.extract_strided_slice %0 {offsets = [0, 0], sizes = [128, 1], strides = [1, 1]} : vector<128x2xf32> to vector<128x1xf32>
    %c0_3 = arith.constant 0 : index
    %c0_4 = arith.constant 0 : index
    %3 = vector.load %arg2[%c0_3, %c0_4] : memref<2x48xf32, #tpu.memory_space<vmem>>, vector<1x48xf32>
    %4 = vector.broadcast %2 : vector<128x1xf32> to vector<128x48xf32>
    %5 = vector.broadcast %3 : vector<1x48xf32> to vector<128x48xf32>
    %6 = arith.mulf %4, %5 : vector<128x48xf32>
    %7 = vector.broadcast %1 : vector<1x48xf32> to vector<128x48xf32>
    %8 = arith.addf %7, %6 : vector<128x48xf32>
    %9 = vector.extract_strided_slice %0 {offsets = [0, 1], sizes = [128, 1], strides = [1, 1]} : vector<128x2xf32> to vector<128x1xf32>
    %c1 = arith.constant 1 : index
    %c0_5 = arith.constant 0 : index
    %10 = vector.load %arg2[%c1, %c0_5] : memref<2x48xf32, #tpu.memory_space<vmem>>, vector<1x48xf32>
    %11 = vector.broadcast %9 : vector<128x1xf32> to vector<128x48xf32>
    %12 = vector.broadcast %10 : vector<1x48xf32> to vector<128x48xf32>
    %13 = arith.mulf %11, %12 : vector<128x48xf32>
    %14 = arith.addf %8, %13 : vector<128x48xf32>
    %c0_6 = arith.constant 0 : index
    %c0_7 = arith.constant 0 : index
    %15 = vector.load %arg10[%c0_6, %c0_7] : memref<128x48xf32, #tpu.memory_space<vmem>>, vector<128x48xf32>
    tpu.vector_store %arg10[%c0_6, %c0_7], %14 {strides = array<i32>} : memref<128x48xf32, #tpu.memory_space<vmem>>, vector<128x48xf32>,
    %c0_8 = arith.constant 0 : index
    %c0_9 = arith.constant 0 : index
    %16 = vector.load %arg3[%c0_8, %c0_9] : memref<16x48xf32, #tpu.memory_space<vmem>>, vector<16x48xf32>
    %c0_10 = arith.constant 0 : index
    %c0_11 = arith.constant 0 : index
    %17 = vector.load %arg5[%c0_10, %c0_11] : memref<1x48xf32, #tpu.memory_space<vmem>>, vector<1x48xf32>
    %18 = vector.shape_cast %17 : vector<1x48xf32> to vector<1x48xf32>
    %19 = vector.broadcast %18 : vector<1x48xf32> to vector<16x48xf32>
    %c0_12 = arith.constant 0 : index
    %c0_13 = arith.constant 0 : index
    %20 = vector.load %arg1[%c0_12, %c0_13] : memref<16x16xf32, #tpu.memory_space<vmem>>, vector<16x16xf32>
    %c0_i32 = arith.constant 0 : i32
    %c16_i32 = arith.constant 16 : i32
    %21 = arith.muli %c0_i32, %c16_i32 : i32
    %22 = tpu.assume_multiple %21, 8 : i32
    %23 = arith.index_cast %22 : i32 to index
    %c0_14 = arith.constant 0 : index
    %24 = vector.load %arg10[%23, %c0_14] : memref<128x48xf32, #tpu.memory_space<vmem>>, vector<16x48xf32>
    %cst = arith.constant dense<0.000000e+00> : vector<16x48xf32>
    %25 = tpu.matmul %20, %16, %cst {dimension_numbers = #tpu.dot_dimension_numbers<[1], [0], [0], [1], [0, 0, 1, 1], [], []>} : vector<16x16xf32>, vector<16x48xf32>, vector<16x48xf32> -> vector<16x48xf32>
    %26 = arith.addf %25, %19 : vector<16x48xf32>
    %27 = vector.extract_strided_slice %24 {offsets = [0, 0], sizes = [16, 32], strides = [1, 1]} : vector<16x48xf32> to vector<16x32xf32>
    %28 = vector.extract_strided_slice %26 {offsets = [0, 0], sizes = [16, 32], strides = [1, 1]} : vector<16x48xf32> to vector<16x32xf32>
    %29 = arith.addf %27, %28 : vector<16x32xf32>
    %30 = arith.negf %29 : vector<16x32xf32>
    %31 = math.exp %30 : vector<16x32xf32>
    %cst_15 = arith.constant 1.000000e+00 : f32
    %32 = vector.broadcast %cst_15 : f32 to vector<16x32xf32>
    %33 = arith.addf %32, %31 : vector<16x32xf32>
    %34 = arith.divf %32, %33 : vector<16x32xf32>
    %35 = vector.extract_strided_slice %34 {offsets = [0, 0], sizes = [16, 16], strides = [1, 1]} : vector<16x32xf32> to vector<16x16xf32>
    %36 = vector.extract_strided_slice %34 {offsets = [0, 16], sizes = [16, 16], strides = [1, 1]} : vector<16x32xf32> to vector<16x16xf32>
    %37 = vector.extract_strided_slice %24 {offsets = [0, 32], sizes = [16, 16], strides = [1, 1]} : vector<16x48xf32> to vector<16x16xf32>
    %38 = vector.extract_strided_slice %26 {offsets = [0, 32], sizes = [16, 16], strides = [1, 1]} : vector<16x48xf32> to vector<16x16xf32>
    %39 = arith.mulf %35, %38 : vector<16x16xf32>
    %40 = arith.addf %37, %39 : vector<16x16xf32>
    %41 = math.tanh %40 : vector<16x16xf32>
    %42 = arith.subf %20, %41 : vector<16x16xf32>
    %43 = arith.mulf %36, %42 : vector<16x16xf32>
    %44 = arith.addf %41, %43 : vector<16x16xf32>
    %45 = arith.index_cast %22 : i32 to index
    %c0_16 = arith.constant 0 : index
    %46 = vector.load %arg11[%45, %c0_16] : memref<128x16xf32, #tpu.memory_space<vmem>>, vector<16x16xf32>
    tpu.vector_store %arg11[%45, %c0_16], %44 {strides = array<i32>} : memref<128x16xf32, #tpu.memory_space<vmem>>, vector<16x16xf32>,
    %c1_i32 = arith.constant 1 : i32
    %c16_i32_17 = arith.constant 16 : i32
    %47 = arith.muli %c1_i32, %c16_i32_17 : i32
    %48 = tpu.assume_multiple %47, 8 : i32
    %49 = arith.index_cast %48 : i32 to index
    %c0_18 = arith.constant 0 : index
    %50 = vector.load %arg10[%49, %c0_18] : memref<128x48xf32, #tpu.memory_space<vmem>>, vector<16x48xf32>
    %cst_19 = arith.constant dense<0.000000e+00> : vector<16x48xf32>
    %51 = tpu.matmul %44, %16, %cst_19 {dimension_numbers = #tpu.dot_dimension_numbers<[1], [0], [0], [1], [0, 0, 1, 1], [], []>} : vector<16x16xf32>, vector<16x48xf32>, vector<16x48xf32> -> vector<16x48xf32>
    %52 = arith.addf %51, %19 : vector<16x48xf32>
    %53 = vector.extract_strided_slice %50 {offsets = [0, 0], sizes = [16, 32], strides = [1, 1]} : vector<16x48xf32> to vector<16x32xf32>
    %54 = vector.extract_strided_slice %52 {offsets = [0, 0], sizes = [16, 32], strides = [1, 1]} : vector<16x48xf32> to vector<16x32xf32>
    %55 = arith.addf %53, %54 : vector<16x32xf32>
    %56 = arith.negf %55 : vector<16x32xf32>
    %57 = math.exp %56 : vector<16x32xf32>
    %cst_20 = arith.constant 1.000000e+00 : f32
    %58 = vector.broadcast %cst_20 : f32 to vector<16x32xf32>
    %59 = arith.addf %58, %57 : vector<16x32xf32>
    %60 = arith.divf %58, %59 : vector<16x32xf32>
    %61 = vector.extract_strided_slice %60 {offsets = [0, 0], sizes = [16, 16], strides = [1, 1]} : vector<16x32xf32> to vector<16x16xf32>
    %62 = vector.extract_strided_slice %60 {offsets = [0, 16], sizes = [16, 16], strides = [1, 1]} : vector<16x32xf32> to vector<16x16xf32>
    %63 = vector.extract_strided_slice %50 {offsets = [0, 32], sizes = [16, 16], strides = [1, 1]} : vector<16x48xf32> to vector<16x16xf32>
    %64 = vector.extract_strided_slice %52 {offsets = [0, 32], sizes = [16, 16], strides = [1, 1]} : vector<16x48xf32> to vector<16x16xf32>
    %65 = arith.mulf %61, %64 : vector<16x16xf32>
    %66 = arith.addf %63, %65 : vector<16x16xf32>
    %67 = math.tanh %66 : vector<16x16xf32>
    %68 = arith.subf %44, %67 : vector<16x16xf32>
    %69 = arith.mulf %62, %68 : vector<16x16xf32>
    %70 = arith.addf %67, %69 : vector<16x16xf32>
    %71 = arith.index_cast %48 : i32 to index
    %c0_21 = arith.constant 0 : index
    %72 = vector.load %arg11[%71, %c0_21] : memref<128x16xf32, #tpu.memory_space<vmem>>, vector<16x16xf32>
    tpu.vector_store %arg11[%71, %c0_21], %70 {strides = array<i32>} : memref<128x16xf32, #tpu.memory_space<vmem>>, vector<16x16xf32>,
    %c2_i32 = arith.constant 2 : i32
    %c16_i32_22 = arith.constant 16 : i32
    %73 = arith.muli %c2_i32, %c16_i32_22 : i32
    %74 = tpu.assume_multiple %73, 8 : i32
    %75 = arith.index_cast %74 : i32 to index
    %c0_23 = arith.constant 0 : index
    %76 = vector.load %arg10[%75, %c0_23] : memref<128x48xf32, #tpu.memory_space<vmem>>, vector<16x48xf32>
    %cst_24 = arith.constant dense<0.000000e+00> : vector<16x48xf32>
    %77 = tpu.matmul %70, %16, %cst_24 {dimension_numbers = #tpu.dot_dimension_numbers<[1], [0], [0], [1], [0, 0, 1, 1], [], []>} : vector<16x16xf32>, vector<16x48xf32>, vector<16x48xf32> -> vector<16x48xf32>
    %78 = arith.addf %77, %19 : vector<16x48xf32>
    %79 = vector.extract_strided_slice %76 {offsets = [0, 0], sizes = [16, 32], strides = [1, 1]} : vector<16x48xf32> to vector<16x32xf32>
    %80 = vector.extract_strided_slice %78 {offsets = [0, 0], sizes = [16, 32], strides = [1, 1]} : vector<16x48xf32> to vector<16x32xf32>
    %81 = arith.addf %79, %80 : vector<16x32xf32>
    %82 = arith.negf %81 : vector<16x32xf32>
    %83 = math.exp %82 : vector<16x32xf32>
    %cst_25 = arith.constant 1.000000e+00 : f32
    %84 = vector.broadcast %cst_25 : f32 to vector<16x32xf32>
    %85 = arith.addf %84, %83 : vector<16x32xf32>
    %86 = arith.divf %84, %85 : vector<16x32xf32>
    %87 = vector.extract_strided_slice %86 {offsets = [0, 0], sizes = [16, 16], strides = [1, 1]} : vector<16x32xf32> to vector<16x16xf32>
    %88 = vector.extract_strided_slice %86 {offsets = [0, 16], sizes = [16, 16], strides = [1, 1]} : vector<16x32xf32> to vector<16x16xf32>
    %89 = vector.extract_strided_slice %76 {offsets = [0, 32], sizes = [16, 16], strides = [1, 1]} : vector<16x48xf32> to vector<16x16xf32>
    %90 = vector.extract_strided_slice %78 {offsets = [0, 32], sizes = [16, 16], strides = [1, 1]} : vector<16x48xf32> to vector<16x16xf32>
    %91 = arith.mulf %87, %90 : vector<16x16xf32>
    %92 = arith.addf %89, %91 : vector<16x16xf32>
    %93 = math.tanh %92 : vector<16x16xf32>
    %94 = arith.subf %70, %93 : vector<16x16xf32>
    %95 = arith.mulf %88, %94 : vector<16x16xf32>
    %96 = arith.addf %93, %95 : vector<16x16xf32>
    %97 = arith.index_cast %74 : i32 to index
    %c0_26 = arith.constant 0 : index
    %98 = vector.load %arg11[%97, %c0_26] : memref<128x16xf32, #tpu.memory_space<vmem>>, vector<16x16xf32>
    tpu.vector_store %arg11[%97, %c0_26], %96 {strides = array<i32>} : memref<128x16xf32, #tpu.memory_space<vmem>>, vector<16x16xf32>,
    %c3_i32 = arith.constant 3 : i32
    %c16_i32_27 = arith.constant 16 : i32
    %99 = arith.muli %c3_i32, %c16_i32_27 : i32
    %100 = tpu.assume_multiple %99, 8 : i32
    %101 = arith.index_cast %100 : i32 to index
    %c0_28 = arith.constant 0 : index
    %102 = vector.load %arg10[%101, %c0_28] : memref<128x48xf32, #tpu.memory_space<vmem>>, vector<16x48xf32>
    %cst_29 = arith.constant dense<0.000000e+00> : vector<16x48xf32>
    %103 = tpu.matmul %96, %16, %cst_29 {dimension_numbers = #tpu.dot_dimension_numbers<[1], [0], [0], [1], [0, 0, 1, 1], [], []>} : vector<16x16xf32>, vector<16x48xf32>, vector<16x48xf32> -> vector<16x48xf32>
    %104 = arith.addf %103, %19 : vector<16x48xf32>
    %105 = vector.extract_strided_slice %102 {offsets = [0, 0], sizes = [16, 32], strides = [1, 1]} : vector<16x48xf32> to vector<16x32xf32>
    %106 = vector.extract_strided_slice %104 {offsets = [0, 0], sizes = [16, 32], strides = [1, 1]} : vector<16x48xf32> to vector<16x32xf32>
    %107 = arith.addf %105, %106 : vector<16x32xf32>
    %108 = arith.negf %107 : vector<16x32xf32>
    %109 = math.exp %108 : vector<16x32xf32>
    %cst_30 = arith.constant 1.000000e+00 : f32
    %110 = vector.broadcast %cst_30 : f32 to vector<16x32xf32>
    %111 = arith.addf %110, %109 : vector<16x32xf32>
    %112 = arith.divf %110, %111 : vector<16x32xf32>
    %113 = vector.extract_strided_slice %112 {offsets = [0, 0], sizes = [16, 16], strides = [1, 1]} : vector<16x32xf32> to vector<16x16xf32>
    %114 = vector.extract_strided_slice %112 {offsets = [0, 16], sizes = [16, 16], strides = [1, 1]} : vector<16x32xf32> to vector<16x16xf32>
    %115 = vector.extract_strided_slice %102 {offsets = [0, 32], sizes = [16, 16], strides = [1, 1]} : vector<16x48xf32> to vector<16x16xf32>
    %116 = vector.extract_strided_slice %104 {offsets = [0, 32], sizes = [16, 16], strides = [1, 1]} : vector<16x48xf32> to vector<16x16xf32>
    %117 = arith.mulf %113, %116 : vector<16x16xf32>
    %118 = arith.addf %115, %117 : vector<16x16xf32>
    %119 = math.tanh %118 : vector<16x16xf32>
    %120 = arith.subf %96, %119 : vector<16x16xf32>
    %121 = arith.mulf %114, %120 : vector<16x16xf32>
    %122 = arith.addf %119, %121 : vector<16x16xf32>
    %123 = arith.index_cast %100 : i32 to index
    %c0_31 = arith.constant 0 : index
    %124 = vector.load %arg11[%123, %c0_31] : memref<128x16xf32, #tpu.memory_space<vmem>>, vector<16x16xf32>
    tpu.vector_store %arg11[%123, %c0_31], %122 {strides = array<i32>} : memref<128x16xf32, #tpu.memory_space<vmem>>, vector<16x16xf32>,
    %c4_i32 = arith.constant 4 : i32
    %c16_i32_32 = arith.constant 16 : i32
    %125 = arith.muli %c4_i32, %c16_i32_32 : i32
    %126 = tpu.assume_multiple %125, 8 : i32
    %127 = arith.index_cast %126 : i32 to index
    %c0_33 = arith.constant 0 : index
    %128 = vector.load %arg10[%127, %c0_33] : memref<128x48xf32, #tpu.memory_space<vmem>>, vector<16x48xf32>
    %cst_34 = arith.constant dense<0.000000e+00> : vector<16x48xf32>
    %129 = tpu.matmul %122, %16, %cst_34 {dimension_numbers = #tpu.dot_dimension_numbers<[1], [0], [0], [1], [0, 0, 1, 1], [], []>} : vector<16x16xf32>, vector<16x48xf32>, vector<16x48xf32> -> vector<16x48xf32>
    %130 = arith.addf %129, %19 : vector<16x48xf32>
    %131 = vector.extract_strided_slice %128 {offsets = [0, 0], sizes = [16, 32], strides = [1, 1]} : vector<16x48xf32> to vector<16x32xf32>
    %132 = vector.extract_strided_slice %130 {offsets = [0, 0], sizes = [16, 32], strides = [1, 1]} : vector<16x48xf32> to vector<16x32xf32>
    %133 = arith.addf %131, %132 : vector<16x32xf32>
    %134 = arith.negf %133 : vector<16x32xf32>
    %135 = math.exp %134 : vector<16x32xf32>
    %cst_35 = arith.constant 1.000000e+00 : f32
    %136 = vector.broadcast %cst_35 : f32 to vector<16x32xf32>
    %137 = arith.addf %136, %135 : vector<16x32xf32>
    %138 = arith.divf %136, %137 : vector<16x32xf32>
    %139 = vector.extract_strided_slice %138 {offsets = [0, 0], sizes = [16, 16], strides = [1, 1]} : vector<16x32xf32> to vector<16x16xf32>
    %140 = vector.extract_strided_slice %138 {offsets = [0, 16], sizes = [16, 16], strides = [1, 1]} : vector<16x32xf32> to vector<16x16xf32>
    %141 = vector.extract_strided_slice %128 {offsets = [0, 32], sizes = [16, 16], strides = [1, 1]} : vector<16x48xf32> to vector<16x16xf32>
    %142 = vector.extract_strided_slice %130 {offsets = [0, 32], sizes = [16, 16], strides = [1, 1]} : vector<16x48xf32> to vector<16x16xf32>
    %143 = arith.mulf %139, %142 : vector<16x16xf32>
    %144 = arith.addf %141, %143 : vector<16x16xf32>
    %145 = math.tanh %144 : vector<16x16xf32>
    %146 = arith.subf %122, %145 : vector<16x16xf32>
    %147 = arith.mulf %140, %146 : vector<16x16xf32>
    %148 = arith.addf %145, %147 : vector<16x16xf32>
    %149 = arith.index_cast %126 : i32 to index
    %c0_36 = arith.constant 0 : index
    %150 = vector.load %arg11[%149, %c0_36] : memref<128x16xf32, #tpu.memory_space<vmem>>, vector<16x16xf32>
    tpu.vector_store %arg11[%149, %c0_36], %148 {strides = array<i32>} : memref<128x16xf32, #tpu.memory_space<vmem>>, vector<16x16xf32>,
    %c5_i32 = arith.constant 5 : i32
    %c16_i32_37 = arith.constant 16 : i32
    %151 = arith.muli %c5_i32, %c16_i32_37 : i32
    %152 = tpu.assume_multiple %151, 8 : i32
    %153 = arith.index_cast %152 : i32 to index
    %c0_38 = arith.constant 0 : index
    %154 = vector.load %arg10[%153, %c0_38] : memref<128x48xf32, #tpu.memory_space<vmem>>, vector<16x48xf32>
    %cst_39 = arith.constant dense<0.000000e+00> : vector<16x48xf32>
    %155 = tpu.matmul %148, %16, %cst_39 {dimension_numbers = #tpu.dot_dimension_numbers<[1], [0], [0], [1], [0, 0, 1, 1], [], []>} : vector<16x16xf32>, vector<16x48xf32>, vector<16x48xf32> -> vector<16x48xf32>
    %156 = arith.addf %155, %19 : vector<16x48xf32>
    %157 = vector.extract_strided_slice %154 {offsets = [0, 0], sizes = [16, 32], strides = [1, 1]} : vector<16x48xf32> to vector<16x32xf32>
    %158 = vector.extract_strided_slice %156 {offsets = [0, 0], sizes = [16, 32], strides = [1, 1]} : vector<16x48xf32> to vector<16x32xf32>
    %159 = arith.addf %157, %158 : vector<16x32xf32>
    %160 = arith.negf %159 : vector<16x32xf32>
    %161 = math.exp %160 : vector<16x32xf32>
    %cst_40 = arith.constant 1.000000e+00 : f32
    %162 = vector.broadcast %cst_40 : f32 to vector<16x32xf32>
    %163 = arith.addf %162, %161 : vector<16x32xf32>
    %164 = arith.divf %162, %163 : vector<16x32xf32>
    %165 = vector.extract_strided_slice %164 {offsets = [0, 0], sizes = [16, 16], strides = [1, 1]} : vector<16x32xf32> to vector<16x16xf32>
    %166 = vector.extract_strided_slice %164 {offsets = [0, 16], sizes = [16, 16], strides = [1, 1]} : vector<16x32xf32> to vector<16x16xf32>
    %167 = vector.extract_strided_slice %154 {offsets = [0, 32], sizes = [16, 16], strides = [1, 1]} : vector<16x48xf32> to vector<16x16xf32>
    %168 = vector.extract_strided_slice %156 {offsets = [0, 32], sizes = [16, 16], strides = [1, 1]} : vector<16x48xf32> to vector<16x16xf32>
    %169 = arith.mulf %165, %168 : vector<16x16xf32>
    %170 = arith.addf %167, %169 : vector<16x16xf32>
    %171 = math.tanh %170 : vector<16x16xf32>
    %172 = arith.subf %148, %171 : vector<16x16xf32>
    %173 = arith.mulf %166, %172 : vector<16x16xf32>
    %174 = arith.addf %171, %173 : vector<16x16xf32>
    %175 = arith.index_cast %152 : i32 to index
    %c0_41 = arith.constant 0 : index
    %176 = vector.load %arg11[%175, %c0_41] : memref<128x16xf32, #tpu.memory_space<vmem>>, vector<16x16xf32>
    tpu.vector_store %arg11[%175, %c0_41], %174 {strides = array<i32>} : memref<128x16xf32, #tpu.memory_space<vmem>>, vector<16x16xf32>,
    %c6_i32 = arith.constant 6 : i32
    %c16_i32_42 = arith.constant 16 : i32
    %177 = arith.muli %c6_i32, %c16_i32_42 : i32
    %178 = tpu.assume_multiple %177, 8 : i32
    %179 = arith.index_cast %178 : i32 to index
    %c0_43 = arith.constant 0 : index
    %180 = vector.load %arg10[%179, %c0_43] : memref<128x48xf32, #tpu.memory_space<vmem>>, vector<16x48xf32>
    %cst_44 = arith.constant dense<0.000000e+00> : vector<16x48xf32>
    %181 = tpu.matmul %174, %16, %cst_44 {dimension_numbers = #tpu.dot_dimension_numbers<[1], [0], [0], [1], [0, 0, 1, 1], [], []>} : vector<16x16xf32>, vector<16x48xf32>, vector<16x48xf32> -> vector<16x48xf32>
    %182 = arith.addf %181, %19 : vector<16x48xf32>
    %183 = vector.extract_strided_slice %180 {offsets = [0, 0], sizes = [16, 32], strides = [1, 1]} : vector<16x48xf32> to vector<16x32xf32>
    %184 = vector.extract_strided_slice %182 {offsets = [0, 0], sizes = [16, 32], strides = [1, 1]} : vector<16x48xf32> to vector<16x32xf32>
    %185 = arith.addf %183, %184 : vector<16x32xf32>
    %186 = arith.negf %185 : vector<16x32xf32>
    %187 = math.exp %186 : vector<16x32xf32>
    %cst_45 = arith.constant 1.000000e+00 : f32
    %188 = vector.broadcast %cst_45 : f32 to vector<16x32xf32>
    %189 = arith.addf %188, %187 : vector<16x32xf32>
    %190 = arith.divf %188, %189 : vector<16x32xf32>
    %191 = vector.extract_strided_slice %190 {offsets = [0, 0], sizes = [16, 16], strides = [1, 1]} : vector<16x32xf32> to vector<16x16xf32>
    %192 = vector.extract_strided_slice %190 {offsets = [0, 16], sizes = [16, 16], strides = [1, 1]} : vector<16x32xf32> to vector<16x16xf32>
    %193 = vector.extract_strided_slice %180 {offsets = [0, 32], sizes = [16, 16], strides = [1, 1]} : vector<16x48xf32> to vector<16x16xf32>
    %194 = vector.extract_strided_slice %182 {offsets = [0, 32], sizes = [16, 16], strides = [1, 1]} : vector<16x48xf32> to vector<16x16xf32>
    %195 = arith.mulf %191, %194 : vector<16x16xf32>
    %196 = arith.addf %193, %195 : vector<16x16xf32>
    %197 = math.tanh %196 : vector<16x16xf32>
    %198 = arith.subf %174, %197 : vector<16x16xf32>
    %199 = arith.mulf %192, %198 : vector<16x16xf32>
    %200 = arith.addf %197, %199 : vector<16x16xf32>
    %201 = arith.index_cast %178 : i32 to index
    %c0_46 = arith.constant 0 : index
    %202 = vector.load %arg11[%201, %c0_46] : memref<128x16xf32, #tpu.memory_space<vmem>>, vector<16x16xf32>
    tpu.vector_store %arg11[%201, %c0_46], %200 {strides = array<i32>} : memref<128x16xf32, #tpu.memory_space<vmem>>, vector<16x16xf32>,
    %c7_i32 = arith.constant 7 : i32
    %c16_i32_47 = arith.constant 16 : i32
    %203 = arith.muli %c7_i32, %c16_i32_47 : i32
    %204 = tpu.assume_multiple %203, 8 : i32
    %205 = arith.index_cast %204 : i32 to index
    %c0_48 = arith.constant 0 : index
    %206 = vector.load %arg10[%205, %c0_48] : memref<128x48xf32, #tpu.memory_space<vmem>>, vector<16x48xf32>
    %cst_49 = arith.constant dense<0.000000e+00> : vector<16x48xf32>
    %207 = tpu.matmul %200, %16, %cst_49 {dimension_numbers = #tpu.dot_dimension_numbers<[1], [0], [0], [1], [0, 0, 1, 1], [], []>} : vector<16x16xf32>, vector<16x48xf32>, vector<16x48xf32> -> vector<16x48xf32>
    %208 = arith.addf %207, %19 : vector<16x48xf32>
    %209 = vector.extract_strided_slice %206 {offsets = [0, 0], sizes = [16, 32], strides = [1, 1]} : vector<16x48xf32> to vector<16x32xf32>
    %210 = vector.extract_strided_slice %208 {offsets = [0, 0], sizes = [16, 32], strides = [1, 1]} : vector<16x48xf32> to vector<16x32xf32>
    %211 = arith.addf %209, %210 : vector<16x32xf32>
    %212 = arith.negf %211 : vector<16x32xf32>
    %213 = math.exp %212 : vector<16x32xf32>
    %cst_50 = arith.constant 1.000000e+00 : f32
    %214 = vector.broadcast %cst_50 : f32 to vector<16x32xf32>
    %215 = arith.addf %214, %213 : vector<16x32xf32>
    %216 = arith.divf %214, %215 : vector<16x32xf32>
    %217 = vector.extract_strided_slice %216 {offsets = [0, 0], sizes = [16, 16], strides = [1, 1]} : vector<16x32xf32> to vector<16x16xf32>
    %218 = vector.extract_strided_slice %216 {offsets = [0, 16], sizes = [16, 16], strides = [1, 1]} : vector<16x32xf32> to vector<16x16xf32>
    %219 = vector.extract_strided_slice %206 {offsets = [0, 32], sizes = [16, 16], strides = [1, 1]} : vector<16x48xf32> to vector<16x16xf32>
    %220 = vector.extract_strided_slice %208 {offsets = [0, 32], sizes = [16, 16], strides = [1, 1]} : vector<16x48xf32> to vector<16x16xf32>
    %221 = arith.mulf %217, %220 : vector<16x16xf32>
    %222 = arith.addf %219, %221 : vector<16x16xf32>
    %223 = math.tanh %222 : vector<16x16xf32>
    %224 = arith.subf %200, %223 : vector<16x16xf32>
    %225 = arith.mulf %218, %224 : vector<16x16xf32>
    %226 = arith.addf %223, %225 : vector<16x16xf32>
    %227 = arith.index_cast %204 : i32 to index
    %c0_51 = arith.constant 0 : index
    %228 = vector.load %arg11[%227, %c0_51] : memref<128x16xf32, #tpu.memory_space<vmem>>, vector<16x16xf32>
    tpu.vector_store %arg11[%227, %c0_51], %226 {strides = array<i32>} : memref<128x16xf32, #tpu.memory_space<vmem>>, vector<16x16xf32>,
    %c8_i32 = arith.constant 8 : i32
    %c0_52 = arith.constant 0 : index
    %c0_53 = arith.constant 0 : index
    %229 = vector.load %arg9[%c0_52, %c0_53] : memref<16x16xf32, #tpu.memory_space<vmem>>, vector<16x16xf32>
    tpu.vector_store %arg9[%c0_52, %c0_53], %226 {strides = array<i32>} : memref<16x16xf32, #tpu.memory_space<vmem>>, vector<16x16xf32>,
    %c0_54 = arith.constant 0 : index
    %c0_55 = arith.constant 0 : index
    %230 = vector.load %arg6[%c0_54, %c0_55] : memref<1x16xf32, #tpu.memory_space<vmem>>, vector<1x16xf32>
    %c0_56 = arith.constant 0 : index
    %c0_57 = arith.constant 0 : index
    %231 = vector.load %arg11[%c0_56, %c0_57] : memref<128x16xf32, #tpu.memory_space<vmem>>, vector<128x16xf32>
    %cst_58 = arith.constant dense<0.000000e+00> : vector<1x128xf32>
    %232 = tpu.matmul %230, %231, %cst_58 {dimension_numbers = #tpu.dot_dimension_numbers<[1], [1], [0], [0], [0, 0, 1, 0], [], []>} : vector<1x16xf32>, vector<128x16xf32>, vector<1x128xf32> -> vector<1x128xf32>
    %c0_59 = arith.constant 0 : index
    %c0_60 = arith.constant 0 : index
    %233 = vector.load %arg7[%c0_59, %c0_60] : memref<1x1xf32, #tpu.memory_space<vmem>>, vector<1x1xf32>
    %234 = vector.broadcast %233 : vector<1x1xf32> to vector<1x128xf32>
    %235 = arith.addf %232, %234 : vector<1x128xf32>
    %236 = arith.negf %235 : vector<1x128xf32>
    %237 = math.exp %236 : vector<1x128xf32>
    %cst_61 = arith.constant 1.000000e+00 : f32
    %238 = vector.broadcast %cst_61 : f32 to vector<1x128xf32>
    %239 = arith.addf %238, %237 : vector<1x128xf32>
    %240 = arith.divf %238, %239 : vector<1x128xf32>
    %c0_62 = arith.constant 0 : index
    %c0_63 = arith.constant 0 : index
    %241 = vector.load %arg8[%c0_62, %c0_63] : memref<1x128xf32, #tpu.memory_space<vmem>>, vector<1x128xf32>
    tpu.vector_store %arg8[%c0_62, %c0_63], %240 {strides = array<i32>} : memref<1x128xf32, #tpu.memory_space<vmem>>, vector<1x128xf32>,
    return
  }
}

</mosaic_0001>

<llo_original>
// kernel: recurrent_binary_adder.1
$region0: #{recurrent_binary_adder.1}
  #allocation0 [shape = 'u32[]', space=smem, size = 0x4, offset = 0x4, fixed_abs, tag = 'smem constant byte address 0x4 - core index']
  #allocation1 [shape = 'u32[144,128]{1,0:T(1,128)}', space=vmem, size = 0x12000, scoped, tag = 'internal scratch']
  #allocation2 [shape = 'f32[128,48]{1,0:T(8,128)}', space=vmem, size = 0x10000, scoped, tag = 'scratch operand']
  #allocation3 [shape = 'f32[128,16]{1,0:T(8,128)}', space=vmem, size = 0x10000, scoped, tag = 'scratch operand']
  #allocation4 [shape = 'f32[1,1]{1,0:T(1,128)S(1)}', space=vmem, size = 0x200, scoped, tag = 'scoped memory for recurrent_binary_adder.1']
  %s0 = inlined_call_operand.vmem [shape: f32[128,2], index: 0, kind: input, shape index: {}]
  %s1 = inlined_call_operand.vmem [shape: f32[16,16], index: 1, kind: input, shape index: {}]
  %s2 = inlined_call_operand.vmem [shape: f32[2,48], index: 2, kind: input, shape index: {}]
  %s3 = inlined_call_operand.vmem [shape: f32[16,48], index: 3, kind: input, shape index: {}]
  %s4 = inlined_call_operand.vmem [shape: f32[1,48], index: 4, kind: input, shape index: {}]
  %s5 = inlined_call_operand.vmem [shape: f32[1,48], index: 5, kind: input, shape index: {}]
  %s6 = inlined_call_operand.vmem [shape: f32[1,16], index: 6, kind: input, shape index: {}]
  %s7 = inlined_call_operand.<no memory space> [shape: f32[1,1], index: 7, kind: input, shape index: {}]
  %s8 = inlined_call_operand.vmem [shape: f32[1,128], index: 8, kind: output, shape index: {0}]
  %s9 = inlined_call_operand.vmem [shape: f32[16,16], index: 9, kind: output, shape index: {1}]
  %10 = xla_tuple %s8, %s9
  %s11 = sld [smem:[#allocation0]]
  $region50: #{recurrent_binary_adder.1} parent=0
    _
  %s13 = ssub.s32 1, %s11
  %s14 = scalar_select 0, %s13, %s11
  %v15 = vstv %s7
  %16 = vst [vmem:[#allocation4] sm:$0x1] %v15
  // Predicated region
  $region2: #{recurrent_binary_adder.1} parent=0 // pred_check
    _
  $region3: #{recurrent_binary_adder.1} parent=0 // pred_check_branch
    %18 = sbr.rel (0) target = $region5
  $region4: #{recurrent_binary_adder.1} parent=0 // pred_region
    _
  $region5: #{recurrent_binary_adder.1} parent=0 // pred_fallthru
    _
  // Predicated region
  $region6: #{recurrent_binary_adder.1} parent=0 // pred_check
    _
  $region7: #{recurrent_binary_adder.1} parent=0 // pred_check_branch
    %20 = sbr.rel (0) target = $region9
  $region8: #{recurrent_binary_adder.1} parent=0 // pred_region
    _
  $region9: #{recurrent_binary_adder.1} parent=0 // pred_fallthru
    _
  // Predicated region
  $region10: #{recurrent_binary_adder.1} parent=0 // pred_check
    _
  $region11: #{recurrent_binary_adder.1} parent=0 // pred_check_branch
    %22 = sbr.rel (0) target = $region13
  $region12: #{recurrent_binary_adder.1} parent=0 // pred_region
    _
  $region13: #{recurrent_binary_adder.1} parent=0 // pred_fallthru
    _
  // Predicated region
  $region14: #{recurrent_binary_adder.1} parent=0 // pred_check
    _
  $region15: #{recurrent_binary_adder.1} parent=0 // pred_check_branch
    %24 = sbr.rel (0) target = $region17
  $region16: #{recurrent_binary_adder.1} parent=0 // pred_region
    _
  $region17: #{recurrent_binary_adder.1} parent=0 // pred_fallthru
    _
  // Predicated region
  $region18: #{recurrent_binary_adder.1} parent=0 // pred_check
    _
  $region19: #{recurrent_binary_adder.1} parent=0 // pred_check_branch
    %26 = sbr.rel (0) target = $region21
  $region20: #{recurrent_binary_adder.1} parent=0 // pred_region
    _
  $region21: #{recurrent_binary_adder.1} parent=0 // pred_fallthru
    _
  // Predicated region
  $region22: #{recurrent_binary_adder.1} parent=0 // pred_check
    _
  $region23: #{recurrent_binary_adder.1} parent=0 // pred_check_branch
    %28 = sbr.rel (0) target = $region25
  $region24: #{recurrent_binary_adder.1} parent=0 // pred_region
    _
  $region25: #{recurrent_binary_adder.1} parent=0 // pred_fallthru
    _
  // Predicated region
  $region26: #{recurrent_binary_adder.1} parent=0 // pred_check
    _
  $region27: #{recurrent_binary_adder.1} parent=0 // pred_check_branch
    %30 = sbr.rel (0) target = $region29
  $region28: #{recurrent_binary_adder.1} parent=0 // pred_region
    _
  $region29: #{recurrent_binary_adder.1} parent=0 // pred_fallthru
    _
  // Predicated region
  $region30: #{recurrent_binary_adder.1} parent=0 // pred_check
    _
  $region31: #{recurrent_binary_adder.1} parent=0 // pred_check_branch
    %32 = sbr.rel (0) target = $region33
  $region32: #{recurrent_binary_adder.1} parent=0 // pred_region
    _
  $region33: #{recurrent_binary_adder.1} parent=0 // pred_fallthru
    _
  %v33 = vld [vmem:[%s0] sm:$0xff]
  %v34 = vld [vmem:[%s0 + $0x8] sm:$0xff]
  %v35 = vld [vmem:[%s0 + $0x10] sm:$0xff]
  %v36 = vld [vmem:[%s0 + $0x18] sm:$0xff]
  %v37 = vld [vmem:[%s0 + $0x20] sm:$0xff]
  %v38 = vld [vmem:[%s0 + $0x28] sm:$0xff]
  %v39 = vld [vmem:[%s0 + $0x30] sm:$0xff]
  %v40 = vld [vmem:[%s0 + $0x38] sm:$0xff]
  %v41 = vld [vmem:[%s0 + $0x40] sm:$0xff]
  %v42 = vld [vmem:[%s0 + $0x48] sm:$0xff]
  %v43 = vld [vmem:[%s0 + $0x50] sm:$0xff]
  %v44 = vld [vmem:[%s0 + $0x58] sm:$0xff]
  %v45 = vld [vmem:[%s0 + $0x60] sm:$0xff]
  %v46 = vld [vmem:[%s0 + $0x68] sm:$0xff]
  %v47 = vld [vmem:[%s0 + $0x70] sm:$0xff]
  %v48 = vld [vmem:[%s0 + $0x78] sm:$0xff]
  %v49 = vld [vmem:[%s4] sm:$0x1]
  %v50 = vld [vmem:[%s2] sm:$0x1]
  %52 = vset.pattern.permute.xlu0 0
  %53 = vperm.xlu0 %52, %v33
  %v54 = vpop.permute.xlu0 %53
  %57 = vset.pattern.permute.xlu0 0
  %58 = vperm.xlu0 %57, %v34
  %v59 = vpop.permute.xlu0 %58
  %62 = vset.pattern.permute.xlu0 0
  %63 = vperm.xlu0 %62, %v35
  %v64 = vpop.permute.xlu0 %63
  %67 = vset.pattern.permute.xlu0 0
  %68 = vperm.xlu0 %67, %v36
  %v69 = vpop.permute.xlu0 %68
  %72 = vset.pattern.permute.xlu0 0
  %73 = vperm.xlu0 %72, %v37
  %v74 = vpop.permute.xlu0 %73
  %77 = vset.pattern.permute.xlu0 0
  %78 = vperm.xlu0 %77, %v38
  %v79 = vpop.permute.xlu0 %78
  %82 = vset.pattern.permute.xlu0 0
  %83 = vperm.xlu0 %82, %v39
  %v84 = vpop.permute.xlu0 %83
  %87 = vset.pattern.permute.xlu0 0
  %88 = vperm.xlu0 %87, %v40
  %v89 = vpop.permute.xlu0 %88
  %92 = vset.pattern.permute.xlu0 0
  %93 = vperm.xlu0 %92, %v41
  %v94 = vpop.permute.xlu0 %93
  %97 = vset.pattern.permute.xlu0 0
  %98 = vperm.xlu0 %97, %v42
  %v99 = vpop.permute.xlu0 %98
  %102 = vset.pattern.permute.xlu0 0
  %103 = vperm.xlu0 %102, %v43
  %v104 = vpop.permute.xlu0 %103
  %107 = vset.pattern.permute.xlu0 0
  %108 = vperm.xlu0 %107, %v44
  %v109 = vpop.permute.xlu0 %108
  %112 = vset.pattern.permute.xlu0 0
  %113 = vperm.xlu0 %112, %v45
  %v114 = vpop.permute.xlu0 %113
  %117 = vset.pattern.permute.xlu0 0
  %118 = vperm.xlu0 %117, %v46
  %v119 = vpop.permute.xlu0 %118
  %122 = vset.pattern.permute.xlu0 0
  %123 = vperm.xlu0 %122, %v47
  %v124 = vpop.permute.xlu0 %123
  %127 = vset.pattern.permute.xlu0 0
  %128 = vperm.xlu0 %127, %v48
  %v129 = vpop.permute.xlu0 %128
  %v131 = vlaneseq
  %v132 = vshrl.u32 %v131, 7
  %v133 = vsub.s32 0, %v132
  %v134 = vrot.slane %v50, %v133
  %v135 = vmul.f32 %v54, %v134
  %v136 = vmul.f32 %v59, %v134
  %v137 = vmul.f32 %v64, %v134
  %v138 = vmul.f32 %v69, %v134
  %v139 = vmul.f32 %v74, %v134
  %v140 = vmul.f32 %v79, %v134
  %v141 = vmul.f32 %v84, %v134
  %v142 = vmul.f32 %v89, %v134
  %v143 = vmul.f32 %v94, %v134
  %v144 = vmul.f32 %v99, %v134
  %v145 = vmul.f32 %v104, %v134
  %v146 = vmul.f32 %v109, %v134
  %v147 = vmul.f32 %v114, %v134
  %v148 = vmul.f32 %v119, %v134
  %v149 = vmul.f32 %v124, %v134
  %v150 = vmul.f32 %v129, %v134
  %v152 = vlaneseq
  %v153 = vshrl.u32 %v152, 7
  %v154 = vsub.s32 0, %v153
  %v155 = vrot.slane %v49, %v154
  %v157 = vadd.f32 %v155, %v135
  %v158 = vadd.f32 %v155, %v136
  %v159 = vadd.f32 %v155, %v137
  %v160 = vadd.f32 %v155, %v138
  %v161 = vadd.f32 %v155, %v139
  %v162 = vadd.f32 %v155, %v140
  %v163 = vadd.f32 %v155, %v141
  %v164 = vadd.f32 %v155, %v142
  %v165 = vadd.f32 %v155, %v143
  %v166 = vadd.f32 %v155, %v144
  %v167 = vadd.f32 %v155, %v145
  %v168 = vadd.f32 %v155, %v146
  %v169 = vadd.f32 %v155, %v147
  %v170 = vadd.f32 %v155, %v148
  %v171 = vadd.f32 %v155, %v149
  %v172 = vadd.f32 %v155, %v150
  %v173 = vld [vmem:[%s2 + $0x1] sm:$0x1]
  %174 = vset.pattern.permute.xlu0 1
  %175 = vperm.xlu0 %174, %v33
  %v176 = vpop.permute.xlu0 %175
  %178 = vset.pattern.permute.xlu0 1
  %179 = vperm.xlu0 %178, %v34
  %v180 = vpop.permute.xlu0 %179
  %182 = vset.pattern.permute.xlu0 1
  %183 = vperm.xlu0 %182, %v35
  %v184 = vpop.permute.xlu0 %183
  %186 = vset.pattern.permute.xlu0 1
  %187 = vperm.xlu0 %186, %v36
  %v188 = vpop.permute.xlu0 %187
  %190 = vset.pattern.permute.xlu0 1
  %191 = vperm.xlu0 %190, %v37
  %v192 = vpop.permute.xlu0 %191
  %194 = vset.pattern.permute.xlu0 1
  %195 = vperm.xlu0 %194, %v38
  %v196 = vpop.permute.xlu0 %195
  %198 = vset.pattern.permute.xlu0 1
  %199 = vperm.xlu0 %198, %v39
  %v200 = vpop.permute.xlu0 %199
  %202 = vset.pattern.permute.xlu0 1
  %203 = vperm.xlu0 %202, %v40
  %v204 = vpop.permute.xlu0 %203
  %206 = vset.pattern.permute.xlu0 1
  %207 = vperm.xlu0 %206, %v41
  %v208 = vpop.permute.xlu0 %207
  %210 = vset.pattern.permute.xlu0 1
  %211 = vperm.xlu0 %210, %v42
  %v212 = vpop.permute.xlu0 %211
  %214 = vset.pattern.permute.xlu0 1
  %215 = vperm.xlu0 %214, %v43
  %v216 = vpop.permute.xlu0 %215
  %218 = vset.pattern.permute.xlu0 1
  %219 = vperm.xlu0 %218, %v44
  %v220 = vpop.permute.xlu0 %219
  %222 = vset.pattern.permute.xlu0 1
  %223 = vperm.xlu0 %222, %v45
  %v224 = vpop.permute.xlu0 %223
  %226 = vset.pattern.permute.xlu0 1
  %227 = vperm.xlu0 %226, %v46
  %v228 = vpop.permute.xlu0 %227
  %230 = vset.pattern.permute.xlu0 1
  %231 = vperm.xlu0 %230, %v47
  %v232 = vpop.permute.xlu0 %231
  %234 = vset.pattern.permute.xlu0 1
  %235 = vperm.xlu0 %234, %v48
  %v236 = vpop.permute.xlu0 %235
  %v238 = vlaneseq
  %v239 = vshrl.u32 %v238, 7
  %v240 = vsub.s32 0, %v239
  %v241 = vrot.slane %v173, %v240
  %v242 = vmul.f32 %v176, %v241
  %v243 = vmul.f32 %v180, %v241
  %v244 = vmul.f32 %v184, %v241
  %v245 = vmul.f32 %v188, %v241
  %v246 = vmul.f32 %v192, %v241
  %v247 = vmul.f32 %v196, %v241
  %v248 = vmul.f32 %v200, %v241
  %v249 = vmul.f32 %v204, %v241
  %v250 = vmul.f32 %v208, %v241
  %v251 = vmul.f32 %v212, %v241
  %v252 = vmul.f32 %v216, %v241
  %v253 = vmul.f32 %v220, %v241
  %v254 = vmul.f32 %v224, %v241
  %v255 = vmul.f32 %v228, %v241
  %v256 = vmul.f32 %v232, %v241
  %v257 = vmul.f32 %v236, %v241
  %v258 = vadd.f32 %v157, %v242
  %v259 = vadd.f32 %v158, %v243
  %v260 = vadd.f32 %v159, %v244
  %v261 = vadd.f32 %v160, %v245
  %v262 = vadd.f32 %v161, %v246
  %v263 = vadd.f32 %v162, %v247
  %v264 = vadd.f32 %v163, %v248
  %v265 = vadd.f32 %v164, %v249
  %v266 = vadd.f32 %v165, %v250
  %v267 = vadd.f32 %v166, %v251
  %v268 = vadd.f32 %v167, %v252
  %v269 = vadd.f32 %v168, %v253
  %v270 = vadd.f32 %v169, %v254
  %v271 = vadd.f32 %v170, %v255
  %v272 = vadd.f32 %v171, %v256
  %v273 = vadd.f32 %v172, %v257
  %vm274 = vcmask 392192
  %275 = vst.msk [vmem:[#allocation2] sm:$0xff] %vm274, %v258
  %276 = vst.msk [vmem:[#allocation2 + $0x8] sm:$0xff] %vm274, %v259
  %277 = vst.msk [vmem:[#allocation2 + $0x10] sm:$0xff] %vm274, %v260
  %278 = vst.msk [vmem:[#allocation2 + $0x18] sm:$0xff] %vm274, %v261
  %279 = vst.msk [vmem:[#allocation2 + $0x20] sm:$0xff] %vm274, %v262
  %280 = vst.msk [vmem:[#allocation2 + $0x28] sm:$0xff] %vm274, %v263
  %281 = vst.msk [vmem:[#allocation2 + $0x30] sm:$0xff] %vm274, %v264
  %282 = vst.msk [vmem:[#allocation2 + $0x38] sm:$0xff] %vm274, %v265
  %283 = vst.msk [vmem:[#allocation2 + $0x40] sm:$0xff] %vm274, %v266
  %284 = vst.msk [vmem:[#allocation2 + $0x48] sm:$0xff] %vm274, %v267
  %285 = vst.msk [vmem:[#allocation2 + $0x50] sm:$0xff] %vm274, %v268
  %286 = vst.msk [vmem:[#allocation2 + $0x58] sm:$0xff] %vm274, %v269
  %287 = vst.msk [vmem:[#allocation2 + $0x60] sm:$0xff] %vm274, %v270
  %288 = vst.msk [vmem:[#allocation2 + $0x68] sm:$0xff] %vm274, %v271
  %289 = vst.msk [vmem:[#allocation2 + $0x70] sm:$0xff] %vm274, %v272
  %290 = vst.msk [vmem:[#allocation2 + $0x78] sm:$0xff] %vm274, %v273
  %v291 = vld [vmem:[%s3] sm:$0xff]
  %v292 = vld [vmem:[%s3 + $0x8] sm:$0xff]
  %v293 = vld [vmem:[%s5] sm:$0x1]
  %v295 = vlaneseq
  %v296 = vshrl.u32 %v295, 7
  %v297 = vsub.s32 0, %v296
  %v298 = vrot.slane %v293, %v297
  %v300 = vld [vmem:[%s1] sm:$0xff]
  %v301 = vld [vmem:[%s1 + $0x8] sm:$0xff]
  %v302 = vld [vmem:[#allocation2] sm:$0xff]
  %v303 = vld [vmem:[#allocation2 + $0x8] sm:$0xff]
  %vm304 = vcmask 130048
  %v306 = vsel %vm304, %v300, 0
  %v309 = vsel %vm304, %v301, 0
  %311 = vmatprep.subr.mxu0 0.0
  %312 = vmatpush1.msra.mxu0 0.0
  %313 = vmatprep.subr.mxu0 0.0
  %314 = vmatpush1.msra.mxu0 0.0
  %315 = vmatprep.subr.mxu0 0.0
  %316 = vmatpush1.msra.mxu0 0.0
  %317 = vmatprep.subr.mxu0 0.0
  %318 = vmatpush1.msra.mxu0 0.0
  %319 = vmatprep.subr.mxu0 0.0
  %320 = vmatpush1.msra.mxu0 0.0
  %321 = vmatprep.subr.mxu0 0.0
  %322 = vmatpush1.msra.mxu0 0.0
  %323 = vmatprep.subr.mxu0 0.0
  %324 = vmatpush1.msra.mxu0 0.0
  %325 = vmatprep.subr.mxu0 0.0
  %326 = vmatpush1.msra.mxu0 0.0
  %327 = vmatprep.subr.mxu0 0.0
  %328 = vmatpush1.msra.mxu0 0.0
  %329 = vmatprep.subr.mxu0 0.0
  %330 = vmatpush1.msra.mxu0 0.0
  %331 = vmatprep.subr.mxu0 0.0
  %332 = vmatpush1.msra.mxu0 0.0
  %333 = vmatprep.subr.mxu0 0.0
  %334 = vmatpush1.msra.mxu0 0.0
  %335 = vmatprep.subr.mxu0 0.0
  %336 = vmatpush1.msra.mxu0 0.0
  %337 = vmatprep.subr.mxu0 0.0
  %338 = vmatpush1.msra.mxu0 0.0
  %339 = vmatprep.subr.mxu0 0.0
  %340 = vmatpush1.msra.mxu0 %v292
  %341 = vmatprep.subr.mxu0 0.0
  %342 = vmatpush1.msra.mxu0 %v291
  %343 = vmatprep.subr.mxu0 0.0
  %344 = vmatpush2.msra.mxu0 0.0
  %345 = vmatprep.subr.mxu0 0.0
  %346 = vmatpush2.msra.mxu0 0.0
  %347 = vmatprep.subr.mxu0 0.0
  %348 = vmatpush2.msra.mxu0 0.0
  %349 = vmatprep.subr.mxu0 0.0
  %350 = vmatpush2.msra.mxu0 0.0
  %351 = vmatprep.subr.mxu0 0.0
  %352 = vmatpush2.msra.mxu0 0.0
  %353 = vmatprep.subr.mxu0 0.0
  %354 = vmatpush2.msra.mxu0 0.0
  %355 = vmatprep.subr.mxu0 0.0
  %356 = vmatpush2.msra.mxu0 0.0
  %357 = vmatprep.subr.mxu0 0.0
  %358 = vmatpush2.msra.mxu0 0.0
  %359 = vmatprep.subr.mxu0 0.0
  %360 = vmatpush2.msra.mxu0 0.0
  %361 = vmatprep.subr.mxu0 0.0
  %362 = vmatpush2.msra.mxu0 0.0
  %363 = vmatprep.subr.mxu0 0.0
  %364 = vmatpush2.msra.mxu0 0.0
  %365 = vmatprep.subr.mxu0 0.0
  %366 = vmatpush2.msra.mxu0 0.0
  %367 = vmatprep.subr.mxu0 0.0
  %368 = vmatpush2.msra.mxu0 0.0
  %369 = vmatprep.subr.mxu0 0.0
  %370 = vmatpush2.msra.mxu0 0.0
  %371 = vmatprep.subr.mxu0 0.0
  %372 = vmatpush2.msra.mxu0 0.0
  %373 = vmatprep.subr.mxu0 0.0
  %374 = vmatpush2.msra.mxu0 0.0
  %375 = vmatprep.mubr.f32.mxu0 0.0
  %376 = vmatmul.mubr.f32.gmra.mxu0 %v306
  %v377 = vpop.f32.mrf.mxu0
  %v378 = vadd.f32 %v298, %v377
  %v379 = vpop.f32.mrf.mxu0
  %380 = vmatprep.mubr.f32.mxu0 0.0
  %381 = vmatmul.mubr.f32.gmra.mxu0 %v309
  %v382 = vpop.f32.mrf.mxu0
  %v383 = vadd.f32 %v298, %v382
  %v384 = vpop.f32.mrf.mxu0
  %385 = vdwg.mxu0
  %v386 = vadd.f32 %v302, %v378
  %v387 = vadd.f32 %v303, %v383
  %v388 = vxor.u32 %v386, 2147483648
  %v389 = vxor.u32 %v387, 2147483648
  %v390 = vmul.f32 %v388, 1.442695
  %v391 = vpow.pop %v390
  %v392 = vmul.f32 %v389, 1.442695
  %v393 = vpow.pop %v392
  %v394 = vadd.f32 %v391, 1.0
  %v395 = vadd.f32 %v393, 1.0
  %v396 = vrcp.pop %v394
  %v397 = vmul.f32 1.0, %v396
  %v398 = vrcp.pop %v395
  %v399 = vmul.f32 1.0, %v398
  %402 = vrot.lane.b32.xlu0 %v378, 96
  %v403 = vpop.permute.xlu0 %402
  %404 = vrot.lane.b32.xlu0 %v383, 96
  %v405 = vpop.permute.xlu0 %404
  %v408 = vmul.f32 %v397, %v403
  %v409 = vmul.f32 %v399, %v405
  %412 = vrot.lane.b32.xlu0 %v408, 32
  %v413 = vpop.permute.xlu0 %412
  %414 = vrot.lane.b32.xlu0 %v409, 32
  %v415 = vpop.permute.xlu0 %414
  %v418 = vadd.f32 %v302, %v413
  %v419 = vadd.f32 %v303, %v415
  %v420 = vtanh.pop %v418
  %v421 = vtanh.pop %v419
  %424 = vrot.lane.b32.xlu0 %v420, 96
  %v425 = vpop.permute.xlu0 %424
  %426 = vrot.lane.b32.xlu0 %v421, 96
  %v427 = vpop.permute.xlu0 %426
  %v430 = vsub.f32 %v300, %v425
  %v431 = vsub.f32 %v301, %v427
  %434 = vrot.lane.b32.xlu0 %v430, 16
  %v435 = vpop.permute.xlu0 %434
  %436 = vrot.lane.b32.xlu0 %v431, 16
  %v437 = vpop.permute.xlu0 %436
  %v440 = vmul.f32 %v397, %v435
  %v441 = vmul.f32 %v399, %v437
  %444 = vrot.lane.b32.xlu0 %v440, 16
  %v445 = vpop.permute.xlu0 %444
  %446 = vrot.lane.b32.xlu0 %v441, 16
  %v447 = vpop.permute.xlu0 %446
  %v450 = vadd.f32 %v420, %v445
  %v451 = vadd.f32 %v421, %v447
  %454 = vrot.lane.b32.xlu0 %v450, 96
  %v455 = vpop.permute.xlu0 %454
  %456 = vrot.lane.b32.xlu0 %v451, 96
  %v457 = vpop.permute.xlu0 %456
  %460 = vst.msk [vmem:[#allocation3] sm:$0xff] %vm304, %v455
  %461 = vst.msk [vmem:[#allocation3 + $0x8] sm:$0xff] %vm304, %v457
  %s462 = scalar_lea.vmem [#allocation2], 16
  %v463 = vld [vmem:[%s462] sm:$0xff]
  %v464 = vld [vmem:[%s462 + $0x8] sm:$0xff]
  %v465 = vsel %vm304, %v455, 0
  %v467 = vsel %vm304, %v457, 0
  %469 = vmatprep.subr.mxu0 0.0
  %470 = vmatpush1.msra.mxu0 0.0
  %471 = vmatprep.subr.mxu0 0.0
  %472 = vmatpush1.msra.mxu0 0.0
  %473 = vmatprep.subr.mxu0 0.0
  %474 = vmatpush1.msra.mxu0 0.0
  %475 = vmatprep.subr.mxu0 0.0
  %476 = vmatpush1.msra.mxu0 0.0
  %477 = vmatprep.subr.mxu0 0.0
  %478 = vmatpush1.msra.mxu0 0.0
  %479 = vmatprep.subr.mxu0 0.0
  %480 = vmatpush1.msra.mxu0 0.0
  %481 = vmatprep.subr.mxu0 0.0
  %482 = vmatpush1.msra.mxu0 0.0
  %483 = vmatprep.subr.mxu0 0.0
  %484 = vmatpush1.msra.mxu0 0.0
  %485 = vmatprep.subr.mxu0 0.0
  %486 = vmatpush1.msra.mxu0 0.0
  %487 = vmatprep.subr.mxu0 0.0
  %488 = vmatpush1.msra.mxu0 0.0
  %489 = vmatprep.subr.mxu0 0.0
  %490 = vmatpush1.msra.mxu0 0.0
  %491 = vmatprep.subr.mxu0 0.0
  %492 = vmatpush1.msra.mxu0 0.0
  %493 = vmatprep.subr.mxu0 0.0
  %494 = vmatpush1.msra.mxu0 0.0
  %495 = vmatprep.subr.mxu0 0.0
  %496 = vmatpush1.msra.mxu0 0.0
  %497 = vmatprep.subr.mxu0 0.0
  %498 = vmatpush1.msra.mxu0 %v292
  %499 = vmatprep.subr.mxu0 0.0
  %500 = vmatpush1.msra.mxu0 %v291
  %501 = vmatprep.subr.mxu0 0.0
  %502 = vmatpush2.msra.mxu0 0.0
  %503 = vmatprep.subr.mxu0 0.0
  %504 = vmatpush2.msra.mxu0 0.0
  %505 = vmatprep.subr.mxu0 0.0
  %506 = vmatpush2.msra.mxu0 0.0
  %507 = vmatprep.subr.mxu0 0.0
  %508 = vmatpush2.msra.mxu0 0.0
  %509 = vmatprep.subr.mxu0 0.0
  %510 = vmatpush2.msra.mxu0 0.0
  %511 = vmatprep.subr.mxu0 0.0
  %512 = vmatpush2.msra.mxu0 0.0
  %513 = vmatprep.subr.mxu0 0.0
  %514 = vmatpush2.msra.mxu0 0.0
  %515 = vmatprep.subr.mxu0 0.0
  %516 = vmatpush2.msra.mxu0 0.0
  %517 = vmatprep.subr.mxu0 0.0
  %518 = vmatpush2.msra.mxu0 0.0
  %519 = vmatprep.subr.mxu0 0.0
  %520 = vmatpush2.msra.mxu0 0.0
  %521 = vmatprep.subr.mxu0 0.0
  %522 = vmatpush2.msra.mxu0 0.0
  %523 = vmatprep.subr.mxu0 0.0
  %524 = vmatpush2.msra.mxu0 0.0
  %525 = vmatprep.subr.mxu0 0.0
  %526 = vmatpush2.msra.mxu0 0.0
  %527 = vmatprep.subr.mxu0 0.0
  %528 = vmatpush2.msra.mxu0 0.0
  %529 = vmatprep.subr.mxu0 0.0
  %530 = vmatpush2.msra.mxu0 0.0
  %531 = vmatprep.subr.mxu0 0.0
  %532 = vmatpush2.msra.mxu0 0.0
  %533 = vmatprep.mubr.f32.mxu0 0.0
  %534 = vmatmul.mubr.f32.gmra.mxu0 %v465
  %v535 = vpop.f32.mrf.mxu0
  %v536 = vadd.f32 %v298, %v535
  %v537 = vpop.f32.mrf.mxu0
  %538 = vmatprep.mubr.f32.mxu0 0.0
  %539 = vmatmul.mubr.f32.gmra.mxu0 %v467
  %v540 = vpop.f32.mrf.mxu0
  %v541 = vadd.f32 %v298, %v540
  %v542 = vpop.f32.mrf.mxu0
  %543 = vdwg.mxu0
  %v544 = vadd.f32 %v463, %v536
  %v545 = vadd.f32 %v464, %v541
  %v546 = vxor.u32 %v544, 2147483648
  %v547 = vxor.u32 %v545, 2147483648
  %v548 = vmul.f32 %v546, 1.442695
  %v549 = vpow.pop %v548
  %v550 = vmul.f32 %v547, 1.442695
  %v551 = vpow.pop %v550
  %v552 = vadd.f32 %v549, 1.0
  %v553 = vadd.f32 %v551, 1.0
  %v554 = vrcp.pop %v552
  %v555 = vmul.f32 1.0, %v554
  %v556 = vrcp.pop %v553
  %v557 = vmul.f32 1.0, %v556
  %560 = vrot.lane.b32.xlu0 %v536, 96
  %v561 = vpop.permute.xlu0 %560
  %562 = vrot.lane.b32.xlu0 %v541, 96
  %v563 = vpop.permute.xlu0 %562
  %v566 = vmul.f32 %v555, %v561
  %v567 = vmul.f32 %v557, %v563
  %570 = vrot.lane.b32.xlu0 %v566, 32
  %v571 = vpop.permute.xlu0 %570
  %572 = vrot.lane.b32.xlu0 %v567, 32
  %v573 = vpop.permute.xlu0 %572
  %v576 = vadd.f32 %v463, %v571
  %v577 = vadd.f32 %v464, %v573
  %v578 = vtanh.pop %v576
  %v579 = vtanh.pop %v577
  %v580 = vsub.f32 %v450, %v578
  %v581 = vsub.f32 %v451, %v579
  %584 = vrot.lane.b32.xlu0 %v580, 112
  %v585 = vpop.permute.xlu0 %584
  %586 = vrot.lane.b32.xlu0 %v581, 112
  %v587 = vpop.permute.xlu0 %586
  %v590 = vmul.f32 %v555, %v585
  %v591 = vmul.f32 %v557, %v587
  %594 = vrot.lane.b32.xlu0 %v590, 16
  %v595 = vpop.permute.xlu0 %594
  %596 = vrot.lane.b32.xlu0 %v591, 16
  %v597 = vpop.permute.xlu0 %596
  %v600 = vadd.f32 %v578, %v595
  %v601 = vadd.f32 %v579, %v597
  %604 = vrot.lane.b32.xlu0 %v600, 96
  %v605 = vpop.permute.xlu0 %604
  %606 = vrot.lane.b32.xlu0 %v601, 96
  %v607 = vpop.permute.xlu0 %606
  %s610 = scalar_lea.vmem [#allocation3], 16
  %611 = vst.msk [vmem:[%s610] sm:$0xff] %vm304, %v605
  %612 = vst.msk [vmem:[%s610 + $0x8] sm:$0xff] %vm304, %v607
  %s613 = scalar_lea.vmem [#allocation2], 32
  %v614 = vld [vmem:[%s613] sm:$0xff]
  %v615 = vld [vmem:[%s613 + $0x8] sm:$0xff]
  %v616 = vsel %vm304, %v605, 0
  %v618 = vsel %vm304, %v607, 0
  %620 = vmatprep.subr.mxu0 0.0
  %621 = vmatpush1.msra.mxu0 0.0
  %622 = vmatprep.subr.mxu0 0.0
  %623 = vmatpush1.msra.mxu0 0.0
  %624 = vmatprep.subr.mxu0 0.0
  %625 = vmatpush1.msra.mxu0 0.0
  %626 = vmatprep.subr.mxu0 0.0
  %627 = vmatpush1.msra.mxu0 0.0
  %628 = vmatprep.subr.mxu0 0.0
  %629 = vmatpush1.msra.mxu0 0.0
  %630 = vmatprep.subr.mxu0 0.0
  %631 = vmatpush1.msra.mxu0 0.0
  %632 = vmatprep.subr.mxu0 0.0
  %633 = vmatpush1.msra.mxu0 0.0
  %634 = vmatprep.subr.mxu0 0.0
  %635 = vmatpush1.msra.mxu0 0.0
  %636 = vmatprep.subr.mxu0 0.0
  %637 = vmatpush1.msra.mxu0 0.0
  %638 = vmatprep.subr.mxu0 0.0
  %639 = vmatpush1.msra.mxu0 0.0
  %640 = vmatprep.subr.mxu0 0.0
  %641 = vmatpush1.msra.mxu0 0.0
  %642 = vmatprep.subr.mxu0 0.0
  %643 = vmatpush1.msra.mxu0 0.0
  %644 = vmatprep.subr.mxu0 0.0
  %645 = vmatpush1.msra.mxu0 0.0
  %646 = vmatprep.subr.mxu0 0.0
  %647 = vmatpush1.msra.mxu0 0.0
  %648 = vmatprep.subr.mxu0 0.0
  %649 = vmatpush1.msra.mxu0 %v292
  %650 = vmatprep.subr.mxu0 0.0
  %651 = vmatpush1.msra.mxu0 %v291
  %652 = vmatprep.subr.mxu0 0.0
  %653 = vmatpush2.msra.mxu0 0.0
  %654 = vmatprep.subr.mxu0 0.0
  %655 = vmatpush2.msra.mxu0 0.0
  %656 = vmatprep.subr.mxu0 0.0
  %657 = vmatpush2.msra.mxu0 0.0
  %658 = vmatprep.subr.mxu0 0.0
  %659 = vmatpush2.msra.mxu0 0.0
  %660 = vmatprep.subr.mxu0 0.0
  %661 = vmatpush2.msra.mxu0 0.0
  %662 = vmatprep.subr.mxu0 0.0
  %663 = vmatpush2.msra.mxu0 0.0
  %664 = vmatprep.subr.mxu0 0.0
  %665 = vmatpush2.msra.mxu0 0.0
  %666 = vmatprep.subr.mxu0 0.0
  %667 = vmatpush2.msra.mxu0 0.0
  %668 = vmatprep.subr.mxu0 0.0
  %669 = vmatpush2.msra.mxu0 0.0
  %670 = vmatprep.subr.mxu0 0.0
  %671 = vmatpush2.msra.mxu0 0.0
  %672 = vmatprep.subr.mxu0 0.0
  %673 = vmatpush2.msra.mxu0 0.0
  %674 = vmatprep.subr.mxu0 0.0
  %675 = vmatpush2.msra.mxu0 0.0
  %676 = vmatprep.subr.mxu0 0.0
  %677 = vmatpush2.msra.mxu0 0.0
  %678 = vmatprep.subr.mxu0 0.0
  %679 = vmatpush2.msra.mxu0 0.0
  %680 = vmatprep.subr.mxu0 0.0
  %681 = vmatpush2.msra.mxu0 0.0
  %682 = vmatprep.subr.mxu0 0.0
  %683 = vmatpush2.msra.mxu0 0.0
  %684 = vmatprep.mubr.f32.mxu0 0.0
  %685 = vmatmul.mubr.f32.gmra.mxu0 %v616
  %v686 = vpop.f32.mrf.mxu0
  %v687 = vadd.f32 %v298, %v686
  %v688 = vpop.f32.mrf.mxu0
  %689 = vmatprep.mubr.f32.mxu0 0.0
  %690 = vmatmul.mubr.f32.gmra.mxu0 %v618
  %v691 = vpop.f32.mrf.mxu0
  %v692 = vadd.f32 %v298, %v691
  %v693 = vpop.f32.mrf.mxu0
  %694 = vdwg.mxu0
  %v695 = vadd.f32 %v614, %v687
  %v696 = vadd.f32 %v615, %v692
  %v697 = vxor.u32 %v695, 2147483648
  %v698 = vxor.u32 %v696, 2147483648
  %v699 = vmul.f32 %v697, 1.442695
  %v700 = vpow.pop %v699
  %v701 = vmul.f32 %v698, 1.442695
  %v702 = vpow.pop %v701
  %v703 = vadd.f32 %v700, 1.0
  %v704 = vadd.f32 %v702, 1.0
  %v705 = vrcp.pop %v703
  %v706 = vmul.f32 1.0, %v705
  %v707 = vrcp.pop %v704
  %v708 = vmul.f32 1.0, %v707
  %711 = vrot.lane.b32.xlu0 %v687, 96
  %v712 = vpop.permute.xlu0 %711
  %713 = vrot.lane.b32.xlu0 %v692, 96
  %v714 = vpop.permute.xlu0 %713
  %v717 = vmul.f32 %v706, %v712
  %v718 = vmul.f32 %v708, %v714
  %721 = vrot.lane.b32.xlu0 %v717, 32
  %v722 = vpop.permute.xlu0 %721
  %723 = vrot.lane.b32.xlu0 %v718, 32
  %v724 = vpop.permute.xlu0 %723
  %v727 = vadd.f32 %v614, %v722
  %v728 = vadd.f32 %v615, %v724
  %v729 = vtanh.pop %v727
  %v730 = vtanh.pop %v728
  %v731 = vsub.f32 %v600, %v729
  %v732 = vsub.f32 %v601, %v730
  %735 = vrot.lane.b32.xlu0 %v731, 112
  %v736 = vpop.permute.xlu0 %735
  %737 = vrot.lane.b32.xlu0 %v732, 112
  %v738 = vpop.permute.xlu0 %737
  %v741 = vmul.f32 %v706, %v736
  %v742 = vmul.f32 %v708, %v738
  %745 = vrot.lane.b32.xlu0 %v741, 16
  %v746 = vpop.permute.xlu0 %745
  %747 = vrot.lane.b32.xlu0 %v742, 16
  %v748 = vpop.permute.xlu0 %747
  %v751 = vadd.f32 %v729, %v746
  %v752 = vadd.f32 %v730, %v748
  %755 = vrot.lane.b32.xlu0 %v751, 96
  %v756 = vpop.permute.xlu0 %755
  %757 = vrot.lane.b32.xlu0 %v752, 96
  %v758 = vpop.permute.xlu0 %757
  %s761 = scalar_lea.vmem [#allocation3], 32
  %762 = vst.msk [vmem:[%s761] sm:$0xff] %vm304, %v756
  %763 = vst.msk [vmem:[%s761 + $0x8] sm:$0xff] %vm304, %v758
  %s764 = scalar_lea.vmem [#allocation2], 48
  %v765 = vld [vmem:[%s764] sm:$0xff]
  %v766 = vld [vmem:[%s764 + $0x8] sm:$0xff]
  %v767 = vsel %vm304, %v756, 0
  %v769 = vsel %vm304, %v758, 0
  %771 = vmatprep.subr.mxu0 0.0
  %772 = vmatpush1.msra.mxu0 0.0
  %773 = vmatprep.subr.mxu0 0.0
  %774 = vmatpush1.msra.mxu0 0.0
  %775 = vmatprep.subr.mxu0 0.0
  %776 = vmatpush1.msra.mxu0 0.0
  %777 = vmatprep.subr.mxu0 0.0
  %778 = vmatpush1.msra.mxu0 0.0
  %779 = vmatprep.subr.mxu0 0.0
  %780 = vmatpush1.msra.mxu0 0.0
  %781 = vmatprep.subr.mxu0 0.0
  %782 = vmatpush1.msra.mxu0 0.0
  %783 = vmatprep.subr.mxu0 0.0
  %784 = vmatpush1.msra.mxu0 0.0
  %785 = vmatprep.subr.mxu0 0.0
  %786 = vmatpush1.msra.mxu0 0.0
  %787 = vmatprep.subr.mxu0 0.0
  %788 = vmatpush1.msra.mxu0 0.0
  %789 = vmatprep.subr.mxu0 0.0
  %790 = vmatpush1.msra.mxu0 0.0
  %791 = vmatprep.subr.mxu0 0.0
  %792 = vmatpush1.msra.mxu0 0.0
  %793 = vmatprep.subr.mxu0 0.0
  %794 = vmatpush1.msra.mxu0 0.0
  %795 = vmatprep.subr.mxu0 0.0
  %796 = vmatpush1.msra.mxu0 0.0
  %797 = vmatprep.subr.mxu0 0.0
  %798 = vmatpush1.msra.mxu0 0.0
  %799 = vmatprep.subr.mxu0 0.0
  %800 = vmatpush1.msra.mxu0 %v292
  %801 = vmatprep.subr.mxu0 0.0
  %802 = vmatpush1.msra.mxu0 %v291
  %803 = vmatprep.subr.mxu0 0.0
  %804 = vmatpush2.msra.mxu0 0.0
  %805 = vmatprep.subr.mxu0 0.0
  %806 = vmatpush2.msra.mxu0 0.0
  %807 = vmatprep.subr.mxu0 0.0
  %808 = vmatpush2.msra.mxu0 0.0
  %809 = vmatprep.subr.mxu0 0.0
  %810 = vmatpush2.msra.mxu0 0.0
  %811 = vmatprep.subr.mxu0 0.0
  %812 = vmatpush2.msra.mxu0 0.0
  %813 = vmatprep.subr.mxu0 0.0
  %814 = vmatpush2.msra.mxu0 0.0
  %815 = vmatprep.subr.mxu0 0.0
  %816 = vmatpush2.msra.mxu0 0.0
  %817 = vmatprep.subr.mxu0 0.0
  %818 = vmatpush2.msra.mxu0 0.0
  %819 = vmatprep.subr.mxu0 0.0
  %820 = vmatpush2.msra.mxu0 0.0
  %821 = vmatprep.subr.mxu0 0.0
  %822 = vmatpush2.msra.mxu0 0.0
  %823 = vmatprep.subr.mxu0 0.0
  %824 = vmatpush2.msra.mxu0 0.0
  %825 = vmatprep.subr.mxu0 0.0
  %826 = vmatpush2.msra.mxu0 0.0
  %827 = vmatprep.subr.mxu0 0.0
  %828 = vmatpush2.msra.mxu0 0.0
  %829 = vmatprep.subr.mxu0 0.0
  %830 = vmatpush2.msra.mxu0 0.0
  %831 = vmatprep.subr.mxu0 0.0
  %832 = vmatpush2.msra.mxu0 0.0
  %833 = vmatprep.subr.mxu0 0.0
  %834 = vmatpush2.msra.mxu0 0.0
  %835 = vmatprep.mubr.f32.mxu0 0.0
  %836 = vmatmul.mubr.f32.gmra.mxu0 %v767
  %v837 = vpop.f32.mrf.mxu0
  %v838 = vadd.f32 %v298, %v837
  %v839 = vpop.f32.mrf.mxu0
  %840 = vmatprep.mubr.f32.mxu0 0.0
  %841 = vmatmul.mubr.f32.gmra.mxu0 %v769
  %v842 = vpop.f32.mrf.mxu0
  %v843 = vadd.f32 %v298, %v842
  %v844 = vpop.f32.mrf.mxu0
  %845 = vdwg.mxu0
  %v846 = vadd.f32 %v765, %v838
  %v847 = vadd.f32 %v766, %v843
  %v848 = vxor.u32 %v846, 2147483648
  %v849 = vxor.u32 %v847, 2147483648
  %v850 = vmul.f32 %v848, 1.442695
  %v851 = vpow.pop %v850
  %v852 = vmul.f32 %v849, 1.442695
  %v853 = vpow.pop %v852
  %v854 = vadd.f32 %v851, 1.0
  %v855 = vadd.f32 %v853, 1.0
  %v856 = vrcp.pop %v854
  %v857 = vmul.f32 1.0, %v856
  %v858 = vrcp.pop %v855
  %v859 = vmul.f32 1.0, %v858
  %862 = vrot.lane.b32.xlu0 %v838, 96
  %v863 = vpop.permute.xlu0 %862
  %864 = vrot.lane.b32.xlu0 %v843, 96
  %v865 = vpop.permute.xlu0 %864
  %v868 = vmul.f32 %v857, %v863
  %v869 = vmul.f32 %v859, %v865
  %872 = vrot.lane.b32.xlu0 %v868, 32
  %v873 = vpop.permute.xlu0 %872
  %874 = vrot.lane.b32.xlu0 %v869, 32
  %v875 = vpop.permute.xlu0 %874
  %v878 = vadd.f32 %v765, %v873
  %v879 = vadd.f32 %v766, %v875
  %v880 = vtanh.pop %v878
  %v881 = vtanh.pop %v879
  %v882 = vsub.f32 %v751, %v880
  %v883 = vsub.f32 %v752, %v881
  %886 = vrot.lane.b32.xlu0 %v882, 112
  %v887 = vpop.permute.xlu0 %886
  %888 = vrot.lane.b32.xlu0 %v883, 112
  %v889 = vpop.permute.xlu0 %888
  %v892 = vmul.f32 %v857, %v887
  %v893 = vmul.f32 %v859, %v889
  %896 = vrot.lane.b32.xlu0 %v892, 16
  %v897 = vpop.permute.xlu0 %896
  %898 = vrot.lane.b32.xlu0 %v893, 16
  %v899 = vpop.permute.xlu0 %898
  %v902 = vadd.f32 %v880, %v897
  %v903 = vadd.f32 %v881, %v899
  %906 = vrot.lane.b32.xlu0 %v902, 96
  %v907 = vpop.permute.xlu0 %906
  %908 = vrot.lane.b32.xlu0 %v903, 96
  %v909 = vpop.permute.xlu0 %908
  %s912 = scalar_lea.vmem [#allocation3], 48
  %913 = vst.msk [vmem:[%s912] sm:$0xff] %vm304, %v907
  %914 = vst.msk [vmem:[%s912 + $0x8] sm:$0xff] %vm304, %v909
  %s915 = scalar_lea.vmem [#allocation2], 64
  %v916 = vld [vmem:[%s915] sm:$0xff]
  %v917 = vld [vmem:[%s915 + $0x8] sm:$0xff]
  %v918 = vsel %vm304, %v907, 0
  %v920 = vsel %vm304, %v909, 0
  %922 = vmatprep.subr.mxu0 0.0
  %923 = vmatpush1.msra.mxu0 0.0
  %924 = vmatprep.subr.mxu0 0.0
  %925 = vmatpush1.msra.mxu0 0.0
  %926 = vmatprep.subr.mxu0 0.0
  %927 = vmatpush1.msra.mxu0 0.0
  %928 = vmatprep.subr.mxu0 0.0
  %929 = vmatpush1.msra.mxu0 0.0
  %930 = vmatprep.subr.mxu0 0.0
  %931 = vmatpush1.msra.mxu0 0.0
  %932 = vmatprep.subr.mxu0 0.0
  %933 = vmatpush1.msra.mxu0 0.0
  %934 = vmatprep.subr.mxu0 0.0
  %935 = vmatpush1.msra.mxu0 0.0
  %936 = vmatprep.subr.mxu0 0.0
  %937 = vmatpush1.msra.mxu0 0.0
  %938 = vmatprep.subr.mxu0 0.0
  %939 = vmatpush1.msra.mxu0 0.0
  %940 = vmatprep.subr.mxu0 0.0
  %941 = vmatpush1.msra.mxu0 0.0
  %942 = vmatprep.subr.mxu0 0.0
  %943 = vmatpush1.msra.mxu0 0.0
  %944 = vmatprep.subr.mxu0 0.0
  %945 = vmatpush1.msra.mxu0 0.0
  %946 = vmatprep.subr.mxu0 0.0
  %947 = vmatpush1.msra.mxu0 0.0
  %948 = vmatprep.subr.mxu0 0.0
  %949 = vmatpush1.msra.mxu0 0.0
  %950 = vmatprep.subr.mxu0 0.0
  %951 = vmatpush1.msra.mxu0 %v292
  %952 = vmatprep.subr.mxu0 0.0
  %953 = vmatpush1.msra.mxu0 %v291
  %954 = vmatprep.subr.mxu0 0.0
  %955 = vmatpush2.msra.mxu0 0.0
  %956 = vmatprep.subr.mxu0 0.0
  %957 = vmatpush2.msra.mxu0 0.0
  %958 = vmatprep.subr.mxu0 0.0
  %959 = vmatpush2.msra.mxu0 0.0
  %960 = vmatprep.subr.mxu0 0.0
  %961 = vmatpush2.msra.mxu0 0.0
  %962 = vmatprep.subr.mxu0 0.0
  %963 = vmatpush2.msra.mxu0 0.0
  %964 = vmatprep.subr.mxu0 0.0
  %965 = vmatpush2.msra.mxu0 0.0
  %966 = vmatprep.subr.mxu0 0.0
  %967 = vmatpush2.msra.mxu0 0.0
  %968 = vmatprep.subr.mxu0 0.0
  %969 = vmatpush2.msra.mxu0 0.0
  %970 = vmatprep.subr.mxu0 0.0
  %971 = vmatpush2.msra.mxu0 0.0
  %972 = vmatprep.subr.mxu0 0.0
  %973 = vmatpush2.msra.mxu0 0.0
  %974 = vmatprep.subr.mxu0 0.0
  %975 = vmatpush2.msra.mxu0 0.0
  %976 = vmatprep.subr.mxu0 0.0
  %977 = vmatpush2.msra.mxu0 0.0
  %978 = vmatprep.subr.mxu0 0.0
  %979 = vmatpush2.msra.mxu0 0.0
  %980 = vmatprep.subr.mxu0 0.0
  %981 = vmatpush2.msra.mxu0 0.0
  %982 = vmatprep.subr.mxu0 0.0
  %983 = vmatpush2.msra.mxu0 0.0
  %984 = vmatprep.subr.mxu0 0.0
  %985 = vmatpush2.msra.mxu0 0.0
  %986 = vmatprep.mubr.f32.mxu0 0.0
  %987 = vmatmul.mubr.f32.gmra.mxu0 %v918
  %v988 = vpop.f32.mrf.mxu0
  %v989 = vadd.f32 %v298, %v988
  %v990 = vpop.f32.mrf.mxu0
  %991 = vmatprep.mubr.f32.mxu0 0.0
  %992 = vmatmul.mubr.f32.gmra.mxu0 %v920
  %v993 = vpop.f32.mrf.mxu0
  %v994 = vadd.f32 %v298, %v993
  %v995 = vpop.f32.mrf.mxu0
  %996 = vdwg.mxu0
  %v997 = vadd.f32 %v916, %v989
  %v998 = vadd.f32 %v917, %v994
  %v999 = vxor.u32 %v997, 2147483648
  %v1000 = vxor.u32 %v998, 2147483648
  %v1001 = vmul.f32 %v999, 1.442695
  %v1002 = vpow.pop %v1001
  %v1003 = vmul.f32 %v1000, 1.442695
  %v1004 = vpow.pop %v1003
  %v1005 = vadd.f32 %v1002, 1.0
  %v1006 = vadd.f32 %v1004, 1.0
  %v1007 = vrcp.pop %v1005
  %v1008 = vmul.f32 1.0, %v1007
  %v1009 = vrcp.pop %v1006
  %v1010 = vmul.f32 1.0, %v1009
  %1013 = vrot.lane.b32.xlu0 %v989, 96
  %v1014 = vpop.permute.xlu0 %1013
  %1015 = vrot.lane.b32.xlu0 %v994, 96
  %v1016 = vpop.permute.xlu0 %1015
  %v1019 = vmul.f32 %v1008, %v1014
  %v1020 = vmul.f32 %v1010, %v1016
  %1023 = vrot.lane.b32.xlu0 %v1019, 32
  %v1024 = vpop.permute.xlu0 %1023
  %1025 = vrot.lane.b32.xlu0 %v1020, 32
  %v1026 = vpop.permute.xlu0 %1025
  %v1029 = vadd.f32 %v916, %v1024
  %v1030 = vadd.f32 %v917, %v1026
  %v1031 = vtanh.pop %v1029
  %v1032 = vtanh.pop %v1030
  %v1033 = vsub.f32 %v902, %v1031
  %v1034 = vsub.f32 %v903, %v1032
  %1037 = vrot.lane.b32.xlu0 %v1033, 112
  %v1038 = vpop.permute.xlu0 %1037
  %1039 = vrot.lane.b32.xlu0 %v1034, 112
  %v1040 = vpop.permute.xlu0 %1039
  %v1043 = vmul.f32 %v1008, %v1038
  %v1044 = vmul.f32 %v1010, %v1040
  %1047 = vrot.lane.b32.xlu0 %v1043, 16
  %v1048 = vpop.permute.xlu0 %1047
  %1049 = vrot.lane.b32.xlu0 %v1044, 16
  %v1050 = vpop.permute.xlu0 %1049
  %v1053 = vadd.f32 %v1031, %v1048
  %v1054 = vadd.f32 %v1032, %v1050
  %1057 = vrot.lane.b32.xlu0 %v1053, 96
  %v1058 = vpop.permute.xlu0 %1057
  %1059 = vrot.lane.b32.xlu0 %v1054, 96
  %v1060 = vpop.permute.xlu0 %1059
  %s1063 = scalar_lea.vmem [#allocation3], 64
  %1064 = vst.msk [vmem:[%s1063] sm:$0xff] %vm304, %v1058
  %1065 = vst.msk [vmem:[%s1063 + $0x8] sm:$0xff] %vm304, %v1060
  %s1066 = scalar_lea.vmem [#allocation2], 80
  %v1067 = vld [vmem:[%s1066] sm:$0xff]
  %v1068 = vld [vmem:[%s1066 + $0x8] sm:$0xff]
  %v1069 = vsel %vm304, %v1058, 0
  %v1071 = vsel %vm304, %v1060, 0
  %1073 = vmatprep.subr.mxu0 0.0
  %1074 = vmatpush1.msra.mxu0 0.0
  %1075 = vmatprep.subr.mxu0 0.0
  %1076 = vmatpush1.msra.mxu0 0.0
  %1077 = vmatprep.subr.mxu0 0.0
  %1078 = vmatpush1.msra.mxu0 0.0
  %1079 = vmatprep.subr.mxu0 0.0
  %1080 = vmatpush1.msra.mxu0 0.0
  %1081 = vmatprep.subr.mxu0 0.0
  %1082 = vmatpush1.msra.mxu0 0.0
  %1083 = vmatprep.subr.mxu0 0.0
  %1084 = vmatpush1.msra.mxu0 0.0
  %1085 = vmatprep.subr.mxu0 0.0
  %1086 = vmatpush1.msra.mxu0 0.0
  %1087 = vmatprep.subr.mxu0 0.0
  %1088 = vmatpush1.msra.mxu0 0.0
  %1089 = vmatprep.subr.mxu0 0.0
  %1090 = vmatpush1.msra.mxu0 0.0
  %1091 = vmatprep.subr.mxu0 0.0
  %1092 = vmatpush1.msra.mxu0 0.0
  %1093 = vmatprep.subr.mxu0 0.0
  %1094 = vmatpush1.msra.mxu0 0.0
  %1095 = vmatprep.subr.mxu0 0.0
  %1096 = vmatpush1.msra.mxu0 0.0
  %1097 = vmatprep.subr.mxu0 0.0
  %1098 = vmatpush1.msra.mxu0 0.0
  %1099 = vmatprep.subr.mxu0 0.0
  %1100 = vmatpush1.msra.mxu0 0.0
  %1101 = vmatprep.subr.mxu0 0.0
  %1102 = vmatpush1.msra.mxu0 %v292
  %1103 = vmatprep.subr.mxu0 0.0
  %1104 = vmatpush1.msra.mxu0 %v291
  %1105 = vmatprep.subr.mxu0 0.0
  %1106 = vmatpush2.msra.mxu0 0.0
  %1107 = vmatprep.subr.mxu0 0.0
  %1108 = vmatpush2.msra.mxu0 0.0
  %1109 = vmatprep.subr.mxu0 0.0
  %1110 = vmatpush2.msra.mxu0 0.0
  %1111 = vmatprep.subr.mxu0 0.0
  %1112 = vmatpush2.msra.mxu0 0.0
  %1113 = vmatprep.subr.mxu0 0.0
  %1114 = vmatpush2.msra.mxu0 0.0
  %1115 = vmatprep.subr.mxu0 0.0
  %1116 = vmatpush2.msra.mxu0 0.0
  %1117 = vmatprep.subr.mxu0 0.0
  %1118 = vmatpush2.msra.mxu0 0.0
  %1119 = vmatprep.subr.mxu0 0.0
  %1120 = vmatpush2.msra.mxu0 0.0
  %1121 = vmatprep.subr.mxu0 0.0
  %1122 = vmatpush2.msra.mxu0 0.0
  %1123 = vmatprep.subr.mxu0 0.0
  %1124 = vmatpush2.msra.mxu0 0.0
  %1125 = vmatprep.subr.mxu0 0.0
  %1126 = vmatpush2.msra.mxu0 0.0
  %1127 = vmatprep.subr.mxu0 0.0
  %1128 = vmatpush2.msra.mxu0 0.0
  %1129 = vmatprep.subr.mxu0 0.0
  %1130 = vmatpush2.msra.mxu0 0.0
  %1131 = vmatprep.subr.mxu0 0.0
  %1132 = vmatpush2.msra.mxu0 0.0
  %1133 = vmatprep.subr.mxu0 0.0
  %1134 = vmatpush2.msra.mxu0 0.0
  %1135 = vmatprep.subr.mxu0 0.0
  %1136 = vmatpush2.msra.mxu0 0.0
  %1137 = vmatprep.mubr.f32.mxu0 0.0
  %1138 = vmatmul.mubr.f32.gmra.mxu0 %v1069
  %v1139 = vpop.f32.mrf.mxu0
  %v1140 = vadd.f32 %v298, %v1139
  %v1141 = vpop.f32.mrf.mxu0
  %1142 = vmatprep.mubr.f32.mxu0 0.0
  %1143 = vmatmul.mubr.f32.gmra.mxu0 %v1071
  %v1144 = vpop.f32.mrf.mxu0
  %v1145 = vadd.f32 %v298, %v1144
  %v1146 = vpop.f32.mrf.mxu0
  %1147 = vdwg.mxu0
  %v1148 = vadd.f32 %v1067, %v1140
  %v1149 = vadd.f32 %v1068, %v1145
  %v1150 = vxor.u32 %v1148, 2147483648
  %v1151 = vxor.u32 %v1149, 2147483648
  %v1152 = vmul.f32 %v1150, 1.442695
  %v1153 = vpow.pop %v1152
  %v1154 = vmul.f32 %v1151, 1.442695
  %v1155 = vpow.pop %v1154
  %v1156 = vadd.f32 %v1153, 1.0
  %v1157 = vadd.f32 %v1155, 1.0
  %v1158 = vrcp.pop %v1156
  %v1159 = vmul.f32 1.0, %v1158
  %v1160 = vrcp.pop %v1157
  %v1161 = vmul.f32 1.0, %v1160
  %1164 = vrot.lane.b32.xlu0 %v1140, 96
  %v1165 = vpop.permute.xlu0 %1164
  %1166 = vrot.lane.b32.xlu0 %v1145, 96
  %v1167 = vpop.permute.xlu0 %1166
  %v1170 = vmul.f32 %v1159, %v1165
  %v1171 = vmul.f32 %v1161, %v1167
  %1174 = vrot.lane.b32.xlu0 %v1170, 32
  %v1175 = vpop.permute.xlu0 %1174
  %1176 = vrot.lane.b32.xlu0 %v1171, 32
  %v1177 = vpop.permute.xlu0 %1176
  %v1180 = vadd.f32 %v1067, %v1175
  %v1181 = vadd.f32 %v1068, %v1177
  %v1182 = vtanh.pop %v1180
  %v1183 = vtanh.pop %v1181
  %v1184 = vsub.f32 %v1053, %v1182
  %v1185 = vsub.f32 %v1054, %v1183
  %1188 = vrot.lane.b32.xlu0 %v1184, 112
  %v1189 = vpop.permute.xlu0 %1188
  %1190 = vrot.lane.b32.xlu0 %v1185, 112
  %v1191 = vpop.permute.xlu0 %1190
  %v1194 = vmul.f32 %v1159, %v1189
  %v1195 = vmul.f32 %v1161, %v1191
  %1198 = vrot.lane.b32.xlu0 %v1194, 16
  %v1199 = vpop.permute.xlu0 %1198
  %1200 = vrot.lane.b32.xlu0 %v1195, 16
  %v1201 = vpop.permute.xlu0 %1200
  %v1204 = vadd.f32 %v1182, %v1199
  %v1205 = vadd.f32 %v1183, %v1201
  %1208 = vrot.lane.b32.xlu0 %v1204, 96
  %v1209 = vpop.permute.xlu0 %1208
  %1210 = vrot.lane.b32.xlu0 %v1205, 96
  %v1211 = vpop.permute.xlu0 %1210
  %s1214 = scalar_lea.vmem [#allocation3], 80
  %1215 = vst.msk [vmem:[%s1214] sm:$0xff] %vm304, %v1209
  %1216 = vst.msk [vmem:[%s1214 + $0x8] sm:$0xff] %vm304, %v1211
  %s1217 = scalar_lea.vmem [#allocation2], 96
  %v1218 = vld [vmem:[%s1217] sm:$0xff]
  %v1219 = vld [vmem:[%s1217 + $0x8] sm:$0xff]
  %v1220 = vsel %vm304, %v1209, 0
  %v1222 = vsel %vm304, %v1211, 0
  %1224 = vmatprep.subr.mxu0 0.0
  %1225 = vmatpush1.msra.mxu0 0.0
  %1226 = vmatprep.subr.mxu0 0.0
  %1227 = vmatpush1.msra.mxu0 0.0
  %1228 = vmatprep.subr.mxu0 0.0
  %1229 = vmatpush1.msra.mxu0 0.0
  %1230 = vmatprep.subr.mxu0 0.0
  %1231 = vmatpush1.msra.mxu0 0.0
  %1232 = vmatprep.subr.mxu0 0.0
  %1233 = vmatpush1.msra.mxu0 0.0
  %1234 = vmatprep.subr.mxu0 0.0
  %1235 = vmatpush1.msra.mxu0 0.0
  %1236 = vmatprep.subr.mxu0 0.0
  %1237 = vmatpush1.msra.mxu0 0.0
  %1238 = vmatprep.subr.mxu0 0.0
  %1239 = vmatpush1.msra.mxu0 0.0
  %1240 = vmatprep.subr.mxu0 0.0
  %1241 = vmatpush1.msra.mxu0 0.0
  %1242 = vmatprep.subr.mxu0 0.0
  %1243 = vmatpush1.msra.mxu0 0.0
  %1244 = vmatprep.subr.mxu0 0.0
  %1245 = vmatpush1.msra.mxu0 0.0
  %1246 = vmatprep.subr.mxu0 0.0
  %1247 = vmatpush1.msra.mxu0 0.0
  %1248 = vmatprep.subr.mxu0 0.0
  %1249 = vmatpush1.msra.mxu0 0.0
  %1250 = vmatprep.subr.mxu0 0.0
  %1251 = vmatpush1.msra.mxu0 0.0
  %1252 = vmatprep.subr.mxu0 0.0
  %1253 = vmatpush1.msra.mxu0 %v292
  %1254 = vmatprep.subr.mxu0 0.0
  %1255 = vmatpush1.msra.mxu0 %v291
  %1256 = vmatprep.subr.mxu0 0.0
  %1257 = vmatpush2.msra.mxu0 0.0
  %1258 = vmatprep.subr.mxu0 0.0
  %1259 = vmatpush2.msra.mxu0 0.0
  %1260 = vmatprep.subr.mxu0 0.0
  %1261 = vmatpush2.msra.mxu0 0.0
  %1262 = vmatprep.subr.mxu0 0.0
  %1263 = vmatpush2.msra.mxu0 0.0
  %1264 = vmatprep.subr.mxu0 0.0
  %1265 = vmatpush2.msra.mxu0 0.0
  %1266 = vmatprep.subr.mxu0 0.0
  %1267 = vmatpush2.msra.mxu0 0.0
  %1268 = vmatprep.subr.mxu0 0.0
  %1269 = vmatpush2.msra.mxu0 0.0
  %1270 = vmatprep.subr.mxu0 0.0
  %1271 = vmatpush2.msra.mxu0 0.0
  %1272 = vmatprep.subr.mxu0 0.0
  %1273 = vmatpush2.msra.mxu0 0.0
  %1274 = vmatprep.subr.mxu0 0.0
  %1275 = vmatpush2.msra.mxu0 0.0
  %1276 = vmatprep.subr.mxu0 0.0
  %1277 = vmatpush2.msra.mxu0 0.0
  %1278 = vmatprep.subr.mxu0 0.0
  %1279 = vmatpush2.msra.mxu0 0.0
  %1280 = vmatprep.subr.mxu0 0.0
  %1281 = vmatpush2.msra.mxu0 0.0
  %1282 = vmatprep.subr.mxu0 0.0
  %1283 = vmatpush2.msra.mxu0 0.0
  %1284 = vmatprep.subr.mxu0 0.0
  %1285 = vmatpush2.msra.mxu0 0.0
  %1286 = vmatprep.subr.mxu0 0.0
  %1287 = vmatpush2.msra.mxu0 0.0
  %1288 = vmatprep.mubr.f32.mxu0 0.0
  %1289 = vmatmul.mubr.f32.gmra.mxu0 %v1220
  %v1290 = vpop.f32.mrf.mxu0
  %v1291 = vadd.f32 %v298, %v1290
  %v1292 = vpop.f32.mrf.mxu0
  %1293 = vmatprep.mubr.f32.mxu0 0.0
  %1294 = vmatmul.mubr.f32.gmra.mxu0 %v1222
  %v1295 = vpop.f32.mrf.mxu0
  %v1296 = vadd.f32 %v298, %v1295
  %v1297 = vpop.f32.mrf.mxu0
  %1298 = vdwg.mxu0
  %v1299 = vadd.f32 %v1218, %v1291
  %v1300 = vadd.f32 %v1219, %v1296
  %v1301 = vxor.u32 %v1299, 2147483648
  %v1302 = vxor.u32 %v1300, 2147483648
  %v1303 = vmul.f32 %v1301, 1.442695
  %v1304 = vpow.pop %v1303
  %v1305 = vmul.f32 %v1302, 1.442695
  %v1306 = vpow.pop %v1305
  %v1307 = vadd.f32 %v1304, 1.0
  %v1308 = vadd.f32 %v1306, 1.0
  %v1309 = vrcp.pop %v1307
  %v1310 = vmul.f32 1.0, %v1309
  %v1311 = vrcp.pop %v1308
  %v1312 = vmul.f32 1.0, %v1311
  %1315 = vrot.lane.b32.xlu0 %v1291, 96
  %v1316 = vpop.permute.xlu0 %1315
  %1317 = vrot.lane.b32.xlu0 %v1296, 96
  %v1318 = vpop.permute.xlu0 %1317
  %v1321 = vmul.f32 %v1310, %v1316
  %v1322 = vmul.f32 %v1312, %v1318
  %1325 = vrot.lane.b32.xlu0 %v1321, 32
  %v1326 = vpop.permute.xlu0 %1325
  %1327 = vrot.lane.b32.xlu0 %v1322, 32
  %v1328 = vpop.permute.xlu0 %1327
  %v1331 = vadd.f32 %v1218, %v1326
  %v1332 = vadd.f32 %v1219, %v1328
  %v1333 = vtanh.pop %v1331
  %v1334 = vtanh.pop %v1332
  %v1335 = vsub.f32 %v1204, %v1333
  %v1336 = vsub.f32 %v1205, %v1334
  %1339 = vrot.lane.b32.xlu0 %v1335, 112
  %v1340 = vpop.permute.xlu0 %1339
  %1341 = vrot.lane.b32.xlu0 %v1336, 112
  %v1342 = vpop.permute.xlu0 %1341
  %v1345 = vmul.f32 %v1310, %v1340
  %v1346 = vmul.f32 %v1312, %v1342
  %1349 = vrot.lane.b32.xlu0 %v1345, 16
  %v1350 = vpop.permute.xlu0 %1349
  %1351 = vrot.lane.b32.xlu0 %v1346, 16
  %v1352 = vpop.permute.xlu0 %1351
  %v1355 = vadd.f32 %v1333, %v1350
  %v1356 = vadd.f32 %v1334, %v1352
  %1359 = vrot.lane.b32.xlu0 %v1355, 96
  %v1360 = vpop.permute.xlu0 %1359
  %1361 = vrot.lane.b32.xlu0 %v1356, 96
  %v1362 = vpop.permute.xlu0 %1361
  %s1365 = scalar_lea.vmem [#allocation3], 96
  %1366 = vst.msk [vmem:[%s1365] sm:$0xff] %vm304, %v1360
  %1367 = vst.msk [vmem:[%s1365 + $0x8] sm:$0xff] %vm304, %v1362
  %s1368 = scalar_lea.vmem [#allocation2], 112
  %v1369 = vld [vmem:[%s1368] sm:$0xff]
  %v1370 = vld [vmem:[%s1368 + $0x8] sm:$0xff]
  %v1371 = vsel %vm304, %v1360, 0
  %v1373 = vsel %vm304, %v1362, 0
  %1375 = vmatprep.subr.mxu0 0.0
  %1376 = vmatpush1.msra.mxu0 0.0
  %1377 = vmatprep.subr.mxu0 0.0
  %1378 = vmatpush1.msra.mxu0 0.0
  %1379 = vmatprep.subr.mxu0 0.0
  %1380 = vmatpush1.msra.mxu0 0.0
  %1381 = vmatprep.subr.mxu0 0.0
  %1382 = vmatpush1.msra.mxu0 0.0
  %1383 = vmatprep.subr.mxu0 0.0
  %1384 = vmatpush1.msra.mxu0 0.0
  %1385 = vmatprep.subr.mxu0 0.0
  %1386 = vmatpush1.msra.mxu0 0.0
  %1387 = vmatprep.subr.mxu0 0.0
  %1388 = vmatpush1.msra.mxu0 0.0
  %1389 = vmatprep.subr.mxu0 0.0
  %1390 = vmatpush1.msra.mxu0 0.0
  %1391 = vmatprep.subr.mxu0 0.0
  %1392 = vmatpush1.msra.mxu0 0.0
  %1393 = vmatprep.subr.mxu0 0.0
  %1394 = vmatpush1.msra.mxu0 0.0
  %1395 = vmatprep.subr.mxu0 0.0
  %1396 = vmatpush1.msra.mxu0 0.0
  %1397 = vmatprep.subr.mxu0 0.0
  %1398 = vmatpush1.msra.mxu0 0.0
  %1399 = vmatprep.subr.mxu0 0.0
  %1400 = vmatpush1.msra.mxu0 0.0
  %1401 = vmatprep.subr.mxu0 0.0
  %1402 = vmatpush1.msra.mxu0 0.0
  %1403 = vmatprep.subr.mxu0 0.0
  %1404 = vmatpush1.msra.mxu0 %v292
  %1405 = vmatprep.subr.mxu0 0.0
  %1406 = vmatpush1.msra.mxu0 %v291
  %1407 = vmatprep.subr.mxu0 0.0
  %1408 = vmatpush2.msra.mxu0 0.0
  %1409 = vmatprep.subr.mxu0 0.0
  %1410 = vmatpush2.msra.mxu0 0.0
  %1411 = vmatprep.subr.mxu0 0.0
  %1412 = vmatpush2.msra.mxu0 0.0
  %1413 = vmatprep.subr.mxu0 0.0
  %1414 = vmatpush2.msra.mxu0 0.0
  %1415 = vmatprep.subr.mxu0 0.0
  %1416 = vmatpush2.msra.mxu0 0.0
  %1417 = vmatprep.subr.mxu0 0.0
  %1418 = vmatpush2.msra.mxu0 0.0
  %1419 = vmatprep.subr.mxu0 0.0
  %1420 = vmatpush2.msra.mxu0 0.0
  %1421 = vmatprep.subr.mxu0 0.0
  %1422 = vmatpush2.msra.mxu0 0.0
  %1423 = vmatprep.subr.mxu0 0.0
  %1424 = vmatpush2.msra.mxu0 0.0
  %1425 = vmatprep.subr.mxu0 0.0
  %1426 = vmatpush2.msra.mxu0 0.0
  %1427 = vmatprep.subr.mxu0 0.0
  %1428 = vmatpush2.msra.mxu0 0.0
  %1429 = vmatprep.subr.mxu0 0.0
  %1430 = vmatpush2.msra.mxu0 0.0
  %1431 = vmatprep.subr.mxu0 0.0
  %1432 = vmatpush2.msra.mxu0 0.0
  %1433 = vmatprep.subr.mxu0 0.0
  %1434 = vmatpush2.msra.mxu0 0.0
  %1435 = vmatprep.subr.mxu0 0.0
  %1436 = vmatpush2.msra.mxu0 0.0
  %1437 = vmatprep.subr.mxu0 0.0
  %1438 = vmatpush2.msra.mxu0 0.0
  %1439 = vmatprep.mubr.f32.mxu0 0.0
  %1440 = vmatmul.mubr.f32.gmra.mxu0 %v1371
  %v1441 = vpop.f32.mrf.mxu0
  %v1442 = vadd.f32 %v298, %v1441
  %v1443 = vpop.f32.mrf.mxu0
  %1444 = vmatprep.mubr.f32.mxu0 0.0
  %1445 = vmatmul.mubr.f32.gmra.mxu0 %v1373
  %v1446 = vpop.f32.mrf.mxu0
  %v1447 = vadd.f32 %v298, %v1446
  %v1448 = vpop.f32.mrf.mxu0
  %1449 = vdwg.mxu0
  %v1450 = vadd.f32 %v1369, %v1442
  %v1451 = vadd.f32 %v1370, %v1447
  %v1452 = vxor.u32 %v1450, 2147483648
  %v1453 = vxor.u32 %v1451, 2147483648
  %v1454 = vmul.f32 %v1452, 1.442695
  %v1455 = vpow.pop %v1454
  %v1456 = vmul.f32 %v1453, 1.442695
  %v1457 = vpow.pop %v1456
  %v1458 = vadd.f32 %v1455, 1.0
  %v1459 = vadd.f32 %v1457, 1.0
  %v1460 = vrcp.pop %v1458
  %v1461 = vmul.f32 1.0, %v1460
  %v1462 = vrcp.pop %v1459
  %v1463 = vmul.f32 1.0, %v1462
  %1466 = vrot.lane.b32.xlu0 %v1442, 96
  %v1467 = vpop.permute.xlu0 %1466
  %1468 = vrot.lane.b32.xlu0 %v1447, 96
  %v1469 = vpop.permute.xlu0 %1468
  %v1472 = vmul.f32 %v1461, %v1467
  %v1473 = vmul.f32 %v1463, %v1469
  %1476 = vrot.lane.b32.xlu0 %v1472, 32
  %v1477 = vpop.permute.xlu0 %1476
  %1478 = vrot.lane.b32.xlu0 %v1473, 32
  %v1479 = vpop.permute.xlu0 %1478
  %v1482 = vadd.f32 %v1369, %v1477
  %v1483 = vadd.f32 %v1370, %v1479
  %v1484 = vtanh.pop %v1482
  %v1485 = vtanh.pop %v1483
  %v1486 = vsub.f32 %v1355, %v1484
  %v1487 = vsub.f32 %v1356, %v1485
  %1490 = vrot.lane.b32.xlu0 %v1486, 112
  %v1491 = vpop.permute.xlu0 %1490
  %1492 = vrot.lane.b32.xlu0 %v1487, 112
  %v1493 = vpop.permute.xlu0 %1492
  %v1496 = vmul.f32 %v1461, %v1491
  %v1497 = vmul.f32 %v1463, %v1493
  %1500 = vrot.lane.b32.xlu0 %v1496, 16
  %v1501 = vpop.permute.xlu0 %1500
  %1502 = vrot.lane.b32.xlu0 %v1497, 16
  %v1503 = vpop.permute.xlu0 %1502
  %v1506 = vadd.f32 %v1484, %v1501
  %v1507 = vadd.f32 %v1485, %v1503
  %1510 = vrot.lane.b32.xlu0 %v1506, 96
  %v1511 = vpop.permute.xlu0 %1510
  %1512 = vrot.lane.b32.xlu0 %v1507, 96
  %v1513 = vpop.permute.xlu0 %1512
  %s1516 = scalar_lea.vmem [#allocation3], 112
  %1517 = vst.msk [vmem:[%s1516] sm:$0xff] %vm304, %v1511
  %1518 = vst.msk [vmem:[%s1516 + $0x8] sm:$0xff] %vm304, %v1513
  %1519 = vst.msk [vmem:[%s9] sm:$0xff] %vm304, %v1511
  %1520 = vst.msk [vmem:[%s9 + $0x8] sm:$0xff] %vm304, %v1513
  %v1521 = vld [vmem:[%s6] sm:$0x1]
  %v1522 = vld [vmem:[#allocation3] sm:$0xff]
  %v1523 = vld [vmem:[#allocation3 + $0x8] sm:$0xff]
  %v1524 = vld [vmem:[#allocation3 + $0x10] sm:$0xff]
  %v1525 = vld [vmem:[#allocation3 + $0x18] sm:$0xff]
  %v1526 = vld [vmem:[#allocation3 + $0x20] sm:$0xff]
  %v1527 = vld [vmem:[#allocation3 + $0x28] sm:$0xff]
  %v1528 = vld [vmem:[#allocation3 + $0x30] sm:$0xff]
  %v1529 = vld [vmem:[#allocation3 + $0x38] sm:$0xff]
  %v1530 = vld [vmem:[#allocation3 + $0x40] sm:$0xff]
  %v1531 = vld [vmem:[#allocation3 + $0x48] sm:$0xff]
  %v1532 = vld [vmem:[#allocation3 + $0x50] sm:$0xff]
  %v1533 = vld [vmem:[#allocation3 + $0x58] sm:$0xff]
  %v1534 = vld [vmem:[#allocation3 + $0x60] sm:$0xff]
  %v1535 = vld [vmem:[#allocation3 + $0x68] sm:$0xff]
  %v1536 = vld [vmem:[#allocation3 + $0x70] sm:$0xff]
  %v1537 = vld [vmem:[#allocation3 + $0x78] sm:$0xff]
  %v1538 = vld [vmem:[#allocation4] sm:$0x1]
  %1540 = vset.pattern.permute.xlu0 0
  %1541 = vperm.xlu0 %1540, %v1538
  %v1542 = vpop.permute.xlu0 %1541
  %v1544 = vlaneseq
  %v1545 = vshrl.u32 %v1544, 7
  %v1546 = vsub.s32 0, %v1545
  %v1547 = vrot.slane %v1542, %v1546
  %v1549 = vsel %vm304, %v1521, 0
  %v1552 = vsel %vm304, %v1522, 0
  %v1555 = vsel %vm304, %v1523, 0
  %v1558 = vsel %vm304, %v1524, 0
  %v1561 = vsel %vm304, %v1525, 0
  %v1564 = vsel %vm304, %v1526, 0
  %v1567 = vsel %vm304, %v1527, 0
  %v1570 = vsel %vm304, %v1528, 0
  %v1573 = vsel %vm304, %v1529, 0
  %v1576 = vsel %vm304, %v1530, 0
  %v1579 = vsel %vm304, %v1531, 0
  %v1582 = vsel %vm304, %v1532, 0
  %v1585 = vsel %vm304, %v1533, 0
  %v1588 = vsel %vm304, %v1534, 0
  %v1591 = vsel %vm304, %v1535, 0
  %v1594 = vsel %vm304, %v1536, 0
  %v1597 = vsel %vm304, %v1537, 0
  %1599 = vmatprep.subr.mxu0 0.0
  %1600 = vmatpush1.xpose.msra.mxu0 %v1597
  %1601 = vmatprep.subr.mxu0 0.0
  %1602 = vmatpush1.xpose.msra.mxu0 %v1594
  %1603 = vmatprep.subr.mxu0 0.0
  %1604 = vmatpush1.xpose.msra.mxu0 %v1591
  %1605 = vmatprep.subr.mxu0 0.0
  %1606 = vmatpush1.xpose.msra.mxu0 %v1588
  %1607 = vmatprep.subr.mxu0 0.0
  %1608 = vmatpush1.xpose.msra.mxu0 %v1585
  %1609 = vmatprep.subr.mxu0 0.0
  %1610 = vmatpush1.xpose.msra.mxu0 %v1582
  %1611 = vmatprep.subr.mxu0 0.0
  %1612 = vmatpush1.xpose.msra.mxu0 %v1579
  %1613 = vmatprep.subr.mxu0 0.0
  %1614 = vmatpush1.xpose.msra.mxu0 %v1576
  %1615 = vmatprep.subr.mxu0 0.0
  %1616 = vmatpush1.xpose.msra.mxu0 %v1573
  %1617 = vmatprep.subr.mxu0 0.0
  %1618 = vmatpush1.xpose.msra.mxu0 %v1570
  %1619 = vmatprep.subr.mxu0 0.0
  %1620 = vmatpush1.xpose.msra.mxu0 %v1567
  %1621 = vmatprep.subr.mxu0 0.0
  %1622 = vmatpush1.xpose.msra.mxu0 %v1564
  %1623 = vmatprep.subr.mxu0 0.0
  %1624 = vmatpush1.xpose.msra.mxu0 %v1561
  %1625 = vmatprep.subr.mxu0 0.0
  %1626 = vmatpush1.xpose.msra.mxu0 %v1558
  %1627 = vmatprep.subr.mxu0 0.0
  %1628 = vmatpush1.xpose.msra.mxu0 %v1555
  %1629 = vmatprep.subr.mxu0 0.0
  %1630 = vmatpush1.xpose.msra.mxu0 %v1552
  %1631 = vmatprep.subr.mxu0 0.0
  %1632 = vmatpush2.xpose.msra.mxu0 0.0
  %1633 = vmatprep.subr.mxu0 0.0
  %1634 = vmatpush2.xpose.msra.mxu0 0.0
  %1635 = vmatprep.subr.mxu0 0.0
  %1636 = vmatpush2.xpose.msra.mxu0 0.0
  %1637 = vmatprep.subr.mxu0 0.0
  %1638 = vmatpush2.xpose.msra.mxu0 0.0
  %1639 = vmatprep.subr.mxu0 0.0
  %1640 = vmatpush2.xpose.msra.mxu0 0.0
  %1641 = vmatprep.subr.mxu0 0.0
  %1642 = vmatpush2.xpose.msra.mxu0 0.0
  %1643 = vmatprep.subr.mxu0 0.0
  %1644 = vmatpush2.xpose.msra.mxu0 0.0
  %1645 = vmatprep.subr.mxu0 0.0
  %1646 = vmatpush2.xpose.msra.mxu0 0.0
  %1647 = vmatprep.subr.mxu0 0.0
  %1648 = vmatpush2.xpose.msra.mxu0 0.0
  %1649 = vmatprep.subr.mxu0 0.0
  %1650 = vmatpush2.xpose.msra.mxu0 0.0
  %1651 = vmatprep.subr.mxu0 0.0
  %1652 = vmatpush2.xpose.msra.mxu0 0.0
  %1653 = vmatprep.subr.mxu0 0.0
  %1654 = vmatpush2.xpose.msra.mxu0 0.0
  %1655 = vmatprep.subr.mxu0 0.0
  %1656 = vmatpush2.xpose.msra.mxu0 0.0
  %1657 = vmatprep.subr.mxu0 0.0
  %1658 = vmatpush2.xpose.msra.mxu0 0.0
  %1659 = vmatprep.subr.mxu0 0.0
  %1660 = vmatpush2.xpose.msra.mxu0 0.0
  %1661 = vmatprep.subr.mxu0 0.0
  %1662 = vmatpush2.xpose.msra.mxu0 0.0
  %1663 = vmatprep.mubr.f32.mxu0 0.0
  %1664 = vmatmul.mubr.f32.gmra.mxu0 %v1549
  %v1665 = vpop.f32.mrf.mxu0
  %v1666 = vadd.f32 %v1547, %v1665
  %v1667 = vpop.f32.mrf.mxu0
  %1668 = vdwg.mxu0
  %v1669 = vxor.u32 %v1666, 2147483648
  %v1670 = vmul.f32 %v1669, 1.442695
  %v1671 = vpow.pop %v1670
  %v1672 = vadd.f32 %v1671, 1.0
  %v1673 = vrcp.pop %v1672
  %v1674 = vmul.f32 1.0, %v1673
  %1675 = vst [vmem:[%s8] sm:$0x1] %v1674
  // Predicated region
  $region34: #{recurrent_binary_adder.1} parent=0 // pred_check
    _
  $region35: #{recurrent_binary_adder.1} parent=0 // pred_check_branch
    %1677 = sbr.rel (0) target = $region37
  $region36: #{recurrent_binary_adder.1} parent=0 // pred_region
    _
  $region37: #{recurrent_binary_adder.1} parent=0 // pred_fallthru
    _
  // Predicated region
  $region38: #{recurrent_binary_adder.1} parent=0 // pred_check
    _
  $region39: #{recurrent_binary_adder.1} parent=0 // pred_check_branch
    %1679 = sbr.rel (0) target = $region41
  $region40: #{recurrent_binary_adder.1} parent=0 // pred_region
    _
  $region41: #{recurrent_binary_adder.1} parent=0 // pred_fallthru
    _
  // Predicated region
  $region42: #{recurrent_binary_adder.1} parent=0 // pred_check
    _
  $region43: #{recurrent_binary_adder.1} parent=0 // pred_check_branch
    %1681 = sbr.rel (0) target = $region45
  $region44: #{recurrent_binary_adder.1} parent=0 // pred_region
    _
  $region45: #{recurrent_binary_adder.1} parent=0 // pred_fallthru
    _
  // Predicated region
  $region46: #{recurrent_binary_adder.1} parent=0 // pred_check
    _
  $region47: #{recurrent_binary_adder.1} parent=0 // pred_check_branch
    %1683 = sbr.rel (0) target = $region49
  $region48: #{recurrent_binary_adder.1} parent=0 // pred_region
    _
  $region49: #{recurrent_binary_adder.1} parent=0 // pred_fallthru
    _

</llo_original>
